<compile_context>
chip_gen: v5e
topology: v5e:2x2
jax: 0.10.0
libtpu: 0.0.40
codegen_flags: <defaults>
</compile_context>

<pallas_src>
import math
from functools import partial

import jax
import jax.numpy as jnp
from jax.experimental import pallas as pl
from jax.experimental.pallas import tpu as pltpu


# ----------------------------------------------------------------------------
# Kernel: one grid step = (one batch element, one layer).  Layer axis innermost
# so the activation carried in the (VMEM-resident) output block flows layer ->
# layer for each batch element.
# ----------------------------------------------------------------------------
def decoder_stack_kernel(x_ref, pad_ref,
                         wqkv_ref, wo_ref, g1_ref, b1_ref,
                         w1_ref, w2_ref, g2_ref, b2_ref,
                         out_ref, attn_ref,
                         head_sc, mask_sc,
                         *, n_heads):
    l = pl.program_id(1)
    S, D = out_ref.shape[1], out_ref.shape[2]
    d_k = D // n_heads

    # Layer 0 (per batch element): seed the residual carry and build the
    # pad+causal mask once.  The mask depends only on this batch element's pad
    # positions and S, so it is hoisted out of the per-layer work.
    @pl.when(l == 0)
    def _():
        out_ref[0] = x_ref[0]
        row = jax.lax.broadcasted_iota(jnp.int32, (S, S), 0)
        col = jax.lax.broadcasted_iota(jnp.int32, (S, S), 1)
        causal = (col > row).astype(jnp.float32)                 # strict upper tri
        mask_sc[...] = jnp.maximum(causal, jnp.broadcast_to(pad_ref[0], (S, S)))

    x = out_ref[0]                                  # (S, D) f32 residual stream
    xb = x.astype(jnp.bfloat16)

    # ---- fused QKV projection (1/sqrt(d_k) pre-folded into the Q weights) ----
    qkv = jnp.dot(xb, wqkv_ref[0], preferred_element_type=jnp.float32)  # (S, 3D)
    qkvb = qkv.astype(jnp.bfloat16)

    # Head split via a bf16 VMEM scratch (static unroll, H small).  Values are
    # written already cast, so there is no f32 round trip on the store slot.
    for h in range(n_heads):
        head_sc[0, h] = qkvb[:, h * d_k:(h + 1) * d_k]
        head_sc[1, h] = qkvb[:, D + h * d_k:D + (h + 1) * d_k]
        head_sc[2, h] = qkvb[:, 2 * D + h * d_k:2 * D + (h + 1) * d_k]
    qh = head_sc[0]                                 # (H, S, d_k) bf16
    kh = head_sc[1]
    vh = head_sc[2]

    # ---- head-batched scaled dot-product attention ---------------------------
    scores = jax.lax.dot_general(
        qh, kh, dimension_numbers=(((2,), (2,)), ((0,), (0,))),
        preferred_element_type=jnp.float32)         # (H, S, S) f32

    # masked_fill(-1e9): fully-padded query rows stay uniform after softmax,
    # matching torch.gt(pad + subsequence, 0).masked_fill semantics.
    scores = jnp.where(mask_sc[...] > 0.0, jnp.float32(-1e9), scores)

    m = jnp.max(scores, axis=-1, keepdims=True)
    e = jnp.exp(scores - m)
    denom = jnp.sum(e, axis=-1, keepdims=True)
    attn = e * pl.reciprocal(denom, approx=True)    # (H, S, S) f32
    attn_b = attn.astype(jnp.bfloat16)
    attn_ref[0, 0] = attn_b                         # bf16 writeback, one store

    ctx = jax.lax.dot_general(
        attn_b, vh, dimension_numbers=(((2,), (1,)), ((0,), (0,))),
        preferred_element_type=jnp.float32)         # (H, S, d_k) f32

    # Head merge fused into the output projection: per-head (S,dk)@(dk,D) summed
    # over heads == concat(heads) @ W_O.  No (S, D) scratch round trip.
    proj = jax.lax.dot_general(
        ctx.astype(jnp.bfloat16), wo_ref[0],
        dimension_numbers=(((2,), (1,)), ((0,), (0,))),
        preferred_element_type=jnp.float32)         # (H, S, D) f32
    attn_out = jnp.sum(proj, axis=0)                # (S, D)

    # Residual + LayerNorm 1 (torch eps = 1e-5), f32 stats.
    y = attn_out + x
    mu = jnp.mean(y, axis=-1, keepdims=True)
    var = jnp.mean((y - mu) ** 2, axis=-1, keepdims=True)
    y1 = (y - mu) * jax.lax.rsqrt(var + 1e-5) * g1_ref[0] + b1_ref[0]

    # Position-wise FFN (Linear -> ReLU -> Linear), bf16 MXU, f32 accumulation.
    hid = jnp.maximum(
        jnp.dot(y1.astype(jnp.bfloat16), w1_ref[0],
                preferred_element_type=jnp.float32), 0.0)
    ffn = jnp.dot(hid.astype(jnp.bfloat16), w2_ref[0],
                  preferred_element_type=jnp.float32)

    # Residual + LayerNorm 2, then carry to the next layer via out_ref (its block
    # index is constant along l, so HBM writeback happens once per batch element).
    z = ffn + y1
    mu2 = jnp.mean(z, axis=-1, keepdims=True)
    var2 = jnp.mean((z - mu2) ** 2, axis=-1, keepdims=True)
    out_ref[0] = (z - mu2) * jax.lax.rsqrt(var2 + 1e-5) * g2_ref[0] + b2_ref[0]


# ----------------------------------------------------------------------------
# One-time parameter preparation (hoisted out of the forward pass).
# ----------------------------------------------------------------------------
def prepare_decoder_params(emb_table, layer_params, *, n_heads):
    D = emb_table.shape[1]
    d_k = D // n_heads
    scale = 1.0 / math.sqrt(d_k)
    bf16 = jnp.bfloat16
    wqkv = jnp.stack([jnp.concatenate([p["wq"] * scale, p["wk"], p["wv"]], axis=1)
                      for p in layer_params]).astype(bf16)            # (L, D, 3D)
    # W_O rows are (head, d_k)-ordered -> (H, d_k, D) per layer for the
    # head-batched output projection.
    wo = jnp.stack([p["wo"].reshape(n_heads, d_k, D)
                    for p in layer_params]).astype(bf16)              # (L, H, dk, D)
    w1 = jnp.stack([p["w1"] for p in layer_params]).astype(bf16)      # (L, D, F)
    w2 = jnp.stack([p["w2"] for p in layer_params]).astype(bf16)      # (L, F, D)
    g1 = jnp.stack([p["g1"] for p in layer_params])                   # (L, 1, D) f32
    b1 = jnp.stack([p["b1"] for p in layer_params])
    g2 = jnp.stack([p["g2"] for p in layer_params])
    b2 = jnp.stack([p["b2"] for p in layer_params])
    return dict(emb=emb_table, wqkv=wqkv, wo=wo, w1=w1, w2=w2,
                g1=g1, b1=b1, g2=g2, b2=b2)


# ----------------------------------------------------------------------------
# Forward wrapper.
# ----------------------------------------------------------------------------
def decoder_forward(dec_inputs, params, *, n_heads, trg_pad_idx):
    """dec_inputs: (B, S) int32 token ids.  Returns (out (B,S,D) f32, [attn_l bf16])."""
    B, S = dec_inputs.shape
    emb = params["emb"]
    D = emb.shape[1]
    L = params["wqkv"].shape[0]
    F = params["w1"].shape[2]
    d_k = D // n_heads

    # Embedding gather + sinusoidal positional encoding (plain JAX, O(B*S*D)).
    x = (jnp.take(emb, dec_inputs, axis=0) + sinusoidal_pe(S, D)[None]
         ).astype(jnp.float32)                                        # (B, S, D)
    # O(S) pad indicator; the (S,S) mask is rebuilt once per batch element in-kernel.
    pad = (dec_inputs == trg_pad_idx).astype(jnp.float32)[:, None, :]  # (B, 1, S)

    kernel = partial(decoder_stack_kernel, n_heads=n_heads)

    def wspec(shp):
        return pl.BlockSpec(shp, lambda b, l: (l,) + (0,) * (len(shp) - 1))

    # Explicit VMEM budget: double-buffered in/out blocks + scratches + the live
    # f32 (H,S,S)/(H,S,D)/(S,F) temporaries, with 2x headroom, clamped per review.
    block_bytes = 2 * (S * D * 4 + S * 4 + D * 3 * D * 2 + D * D * 2 + 4 * D * 4
                       + 2 * D * F * 2 + S * D * 4 + n_heads * S * S * 2)
    scratch_bytes = 3 * n_heads * S * d_k * 2 + S * S * 4
    live_bytes = (S * 3 * D * 4 + 2 * n_heads * S * S * 4
                  + n_heads * S * D * 4 + S * F * 4)
    vmem_limit = int(min(100 * 2**20,
                         max(32 * 2**20, 2 * (block_bytes + scratch_bytes + live_bytes))))

    out, attn = pl.pallas_call(
        kernel,
        out_shape=(
            jax.ShapeDtypeStruct((B, S, D), jnp.float32),
            jax.ShapeDtypeStruct((L, B, n_heads, S, S), jnp.bfloat16),  # bf16 maps
        ),
        grid_spec=pltpu.PrefetchScalarGridSpec(
            num_scalar_prefetch=0,
            grid=(B, L),                      # (parallel batch, arbitrary layer)
            in_specs=[
                pl.BlockSpec((1, S, D), lambda b, l: (b, 0, 0)),    # emb + pe
                pl.BlockSpec((1, 1, S), lambda b, l: (b, 0, 0)),    # pad indicator
                wspec((1, D, 3 * D)),                               # fused W_QKV
                wspec((1, n_heads, d_k, D)),                        # W_O per head
                wspec((1, 1, D)), wspec((1, 1, D)),                 # LN1 gamma/beta
                wspec((1, D, F)), wspec((1, F, D)),                 # FFN W1 / W2
                wspec((1, 1, D)), wspec((1, 1, D)),                 # LN2 gamma/beta
            ],
            out_specs=[
                pl.BlockSpec((1, S, D), lambda b, l: (b, 0, 0)),    # residual carry
                pl.BlockSpec((1, 1, n_heads, S, S),
                             lambda b, l: (l, b, 0, 0, 0)),
            ],
            scratch_shapes=[
                pltpu.VMEM((3, n_heads, S, d_k), jnp.bfloat16),     # per-head q/k/v
                pltpu.VMEM((S, S), jnp.float32),                    # pad+causal mask
            ],
        ),
        compiler_params=pltpu.CompilerParams(
            dimension_semantics=("parallel", "arbitrary"),
            vmem_limit_bytes=vmem_limit),
    )(x, pad, params["wqkv"], params["wo"], params["g1"], params["b1"],
      params["w1"], params["w2"], params["g2"], params["b2"])

    return out, [attn[i] for i in range(L)]


# ----------------------------------------------------------------------------
# Glue (plain JAX): positional encoding and parameter init.
# ----------------------------------------------------------------------------
def sinusoidal_pe(S, D):
    pos = jnp.arange(S, dtype=jnp.float32)[:, None]
    div = jnp.exp(jnp.arange(0, D, 2, dtype=jnp.float32) * (-math.log(10000.0) / D))
    pe = jnp.zeros((S, D), dtype=jnp.float32)
    pe = pe.at[:, 0::2].set(jnp.sin(pos * div))
    pe = pe.at[:, 1::2].set(jnp.cos(pos * div))
    return pe


def init_params(key, n_layers, d_model, ffn_hidden):
    layers = []
    for _ in range(n_layers):
        keys = jax.random.split(key, 7)
        key = keys[0]
        s = 0.02
        layers.append({
            "wq": s * jax.random.normal(keys[1], (d_model, d_model), jnp.float32),
            "wk": s * jax.random.normal(keys[2], (d_model, d_model), jnp.float32),
            "wv": s * jax.random.normal(keys[3], (d_model, d_model), jnp.float32),
            "wo": s * jax.random.normal(keys[4], (d_model, d_model), jnp.float32),
            "g1": jnp.ones((1, d_model), jnp.float32),
            "b1": jnp.zeros((1, d_model), jnp.float32),
            "w1": s * jax.random.normal(keys[5], (d_model, ffn_hidden), jnp.float32),
            "w2": s * jax.random.normal(keys[6], (ffn_hidden, d_model), jnp.float32),
            "g2": jnp.ones((1, d_model), jnp.float32),
            "b2": jnp.zeros((1, d_model), jnp.float32),
        })
    return key, layers


# ----------------------------------------------------------------------------
if __name__ == "__main__":
    # Small synthetic config.
    B, S = 2, 8
    d_model, n_heads, ffn_hidden, n_layers = 32, 4, 64, 2
    tgt_voc_size, trg_pad_idx = 50, 0

    key = jax.random.PRNGKey(0)
    key, sub = jax.random.split(key)
    emb_table = 0.02 * jax.random.normal(sub, (tgt_voc_size, d_model), jnp.float32)
    key, layer_params = init_params(key, n_layers, d_model, ffn_hidden)

    # One-time parameter preparation (stacking / bf16 cast / scale folding).
    params = prepare_decoder_params(emb_table, layer_params, n_heads=n_heads)
    params = jax.tree_util.tree_map(jax.block_until_ready, params)

    key, sub = jax.random.split(key)
    dec_inputs = jax.random.randint(sub, (B, S), 0, tgt_voc_size, dtype=jnp.int32)
    # Make a couple of positions the pad token to exercise the pad mask.
    dec_inputs = dec_inputs.at[:, -2:].set(trg_pad_idx)

    fwd = jax.jit(partial(decoder_forward, n_heads=n_heads, trg_pad_idx=trg_pad_idx))
    out, attns = fwd(dec_inputs, params)
    jax.block_until_ready(out)
    for a in attns:
        jax.block_until_ready(a)

    assert out.shape == (B, S, d_model)
    assert all(a.shape == (B, n_heads, S, S) for a in attns)
    assert bool(jnp.isfinite(out).all())
    assert all(bool(jnp.isfinite(a.astype(jnp.float32)).all()) for a in attns)
    print("KERNEL_OK")
</pallas_src>

<mosaic_0001>
module attributes {stable_mosaic.version = 11 : i64} {
  func.func @decoder_stack_kernel(%arg0: i32, %arg1: i32, %arg2: memref<1x8x32xf32, #tpu.memory_space<vmem>>, %arg3: memref<1x1x8xf32, #tpu.memory_space<vmem>>, %arg4: memref<1x32x96xbf16, #tpu.memory_space<vmem>>, %arg5: memref<1x4x8x32xbf16, #tpu.memory_space<vmem>>, %arg6: memref<1x1x32xf32, #tpu.memory_space<vmem>>, %arg7: memref<1x1x32xf32, #tpu.memory_space<vmem>>, %arg8: memref<1x32x64xbf16, #tpu.memory_space<vmem>>, %arg9: memref<1x64x32xbf16, #tpu.memory_space<vmem>>, %arg10: memref<1x1x32xf32, #tpu.memory_space<vmem>>, %arg11: memref<1x1x32xf32, #tpu.memory_space<vmem>>, %arg12: memref<1x8x32xf32, #tpu.memory_space<vmem>>, %arg13: memref<1x1x4x8x8xbf16, #tpu.memory_space<vmem>>, %arg14: memref<3x4x8x8xbf16, #tpu.memory_space<vmem>>, %arg15: memref<8x8xf32, #tpu.memory_space<vmem>>) attributes {dimension_semantics = [#tpu.dimension_semantics<parallel>, #tpu.dimension_semantics<arbitrary>], iteration_bounds = array<i64: 2, 2>, scalar_prefetch = 0 : i64, scratch_operands = 2 : i64, tpu.core_type = #tpu.core_type<tc>, window_params = [{transform_indices = @transform_0, window_bounds = array<i64: 1, 8, 32>}, {transform_indices = @transform_1, window_bounds = array<i64: 1, 1, 8>}, {transform_indices = @transform_2, window_bounds = array<i64: 1, 32, 96>}, {transform_indices = @transform_3, window_bounds = array<i64: 1, 4, 8, 32>}, {transform_indices = @transform_4, window_bounds = array<i64: 1, 1, 32>}, {transform_indices = @transform_5, window_bounds = array<i64: 1, 1, 32>}, {transform_indices = @transform_6, window_bounds = array<i64: 1, 32, 64>}, {transform_indices = @transform_7, window_bounds = array<i64: 1, 64, 32>}, {transform_indices = @transform_8, window_bounds = array<i64: 1, 1, 32>}, {transform_indices = @transform_9, window_bounds = array<i64: 1, 1, 32>}, {transform_indices = @transform_10, window_bounds = array<i64: 1, 8, 32>}, {transform_indices = @transform_11, window_bounds = array<i64: 1, 1, 4, 8, 8>}]} {
    %c0_i32 = arith.constant 0 : i32
    %0 = arith.cmpi eq, %arg1, %c0_i32 : i32
    %1 = arith.extui %0 : i1 to i32
    %c0_i32_0 = arith.constant 0 : i32
    %2 = arith.cmpi ne, %1, %c0_i32_0 : i32
    scf.if %2 {
      %c0_116 = arith.constant 0 : index
      %c0_117 = arith.constant 0 : index
      %c0_118 = arith.constant 0 : index
      %159 = vector.load %arg2[%c0_116, %c0_117, %c0_118] : memref<1x8x32xf32, #tpu.memory_space<vmem>>, vector<1x8x32xf32>
      %160 = vector.shape_cast %159 : vector<1x8x32xf32> to vector<8x32xf32>
      %c0_119 = arith.constant 0 : index
      %c0_120 = arith.constant 0 : index
      %c0_121 = arith.constant 0 : index
      %161 = vector.load %arg12[%c0_119, %c0_120, %c0_121] : memref<1x8x32xf32, #tpu.memory_space<vmem>>, vector<1x8x32xf32>
      %162 = vector.shape_cast %161 : vector<1x8x32xf32> to vector<8x32xf32>
      %163 = vector.shape_cast %160 : vector<8x32xf32> to vector<1x8x32xf32>
      tpu.vector_store %arg12[%c0_119, %c0_120, %c0_121], %163 {strides = array<i32>} : memref<1x8x32xf32, #tpu.memory_space<vmem>>, vector<1x8x32xf32>,
      %164 = tpu.iota {dimensions = array<i32: 0>} : vector<8x8xi32>
      %165 = tpu.iota {dimensions = array<i32: 1>} : vector<8x8xi32>
      %166 = arith.cmpi sgt, %165, %164 : vector<8x8xi32>
      %167 = arith.extui %166 : vector<8x8xi1> to vector<8x8xi32>
      %168 = arith.sitofp %167 : vector<8x8xi32> to vector<8x8xf32>
      %c0_122 = arith.constant 0 : index
      %c0_123 = arith.constant 0 : index
      %c0_124 = arith.constant 0 : index
      %169 = vector.load %arg3[%c0_122, %c0_123, %c0_124] : memref<1x1x8xf32, #tpu.memory_space<vmem>>, vector<1x1x8xf32>
      %170 = vector.shape_cast %169 : vector<1x1x8xf32> to vector<1x8xf32>
      %171 = vector.shape_cast %170 : vector<1x8xf32> to vector<1x8xf32>
      %172 = vector.broadcast %171 : vector<1x8xf32> to vector<8x8xf32>
      %173 = arith.maximumf %168, %172 : vector<8x8xf32>
      %c0_125 = arith.constant 0 : index
      %c0_126 = arith.constant 0 : index
      %174 = vector.load %arg15[%c0_125, %c0_126] : memref<8x8xf32, #tpu.memory_space<vmem>>, vector<8x8xf32>
      tpu.vector_store %arg15[%c0_125, %c0_126], %173 {strides = array<i32>} : memref<8x8xf32, #tpu.memory_space<vmem>>, vector<8x8xf32>,
    } else {
    }
    %c0 = arith.constant 0 : index
    %c0_1 = arith.constant 0 : index
    %c0_2 = arith.constant 0 : index
    %3 = vector.load %arg12[%c0, %c0_1, %c0_2] : memref<1x8x32xf32, #tpu.memory_space<vmem>>, vector<1x8x32xf32>
    %4 = vector.shape_cast %3 : vector<1x8x32xf32> to vector<8x32xf32>
    %5 = arith.truncf %4 : vector<8x32xf32> to vector<8x32xbf16>
    %c0_3 = arith.constant 0 : index
    %c0_4 = arith.constant 0 : index
    %c0_5 = arith.constant 0 : index
    %6 = vector.load %arg4[%c0_3, %c0_4, %c0_5] : memref<1x32x96xbf16, #tpu.memory_space<vmem>>, vector<1x32x96xbf16>
    %7 = vector.shape_cast %6 : vector<1x32x96xbf16> to vector<32x96xbf16>
    %cst = arith.constant dense<0.000000e+00> : vector<8x96xf32>
    %8 = tpu.matmul %5, %7, %cst {dimension_numbers = #tpu.dot_dimension_numbers<[1], [0], [0], [1], [0, 0, 1, 1], [], []>} : vector<8x32xbf16>, vector<32x96xbf16>, vector<8x96xf32> -> vector<8x96xf32>
    %9 = arith.truncf %8 : vector<8x96xf32> to vector<8x96xbf16>
    %10 = vector.extract_strided_slice %9 {offsets = [0, 0], sizes = [8, 8], strides = [1, 1]} : vector<8x96xbf16> to vector<8x8xbf16>
    %c0_6 = arith.constant 0 : index
    %c0_7 = arith.constant 0 : index
    %c0_8 = arith.constant 0 : index
    %c0_9 = arith.constant 0 : index
    %11 = vector.load %arg14[%c0_6, %c0_7, %c0_8, %c0_9] : memref<3x4x8x8xbf16, #tpu.memory_space<vmem>>, vector<1x1x8x8xbf16>
    %12 = vector.shape_cast %11 : vector<1x1x8x8xbf16> to vector<8x8xbf16>
    %13 = vector.shape_cast %10 : vector<8x8xbf16> to vector<1x1x8x8xbf16>
    tpu.vector_store %arg14[%c0_6, %c0_7, %c0_8, %c0_9], %13 {strides = array<i32>} : memref<3x4x8x8xbf16, #tpu.memory_space<vmem>>, vector<1x1x8x8xbf16>,
    %14 = vector.extract_strided_slice %9 {offsets = [0, 32], sizes = [8, 8], strides = [1, 1]} : vector<8x96xbf16> to vector<8x8xbf16>
    %c1 = arith.constant 1 : index
    %c0_10 = arith.constant 0 : index
    %c0_11 = arith.constant 0 : index
    %c0_12 = arith.constant 0 : index
    %15 = vector.load %arg14[%c1, %c0_10, %c0_11, %c0_12] : memref<3x4x8x8xbf16, #tpu.memory_space<vmem>>, vector<1x1x8x8xbf16>
    %16 = vector.shape_cast %15 : vector<1x1x8x8xbf16> to vector<8x8xbf16>
    %17 = vector.shape_cast %14 : vector<8x8xbf16> to vector<1x1x8x8xbf16>
    tpu.vector_store %arg14[%c1, %c0_10, %c0_11, %c0_12], %17 {strides = array<i32>} : memref<3x4x8x8xbf16, #tpu.memory_space<vmem>>, vector<1x1x8x8xbf16>,
    %18 = vector.extract_strided_slice %9 {offsets = [0, 64], sizes = [8, 8], strides = [1, 1]} : vector<8x96xbf16> to vector<8x8xbf16>
    %c2 = arith.constant 2 : index
    %c0_13 = arith.constant 0 : index
    %c0_14 = arith.constant 0 : index
    %c0_15 = arith.constant 0 : index
    %19 = vector.load %arg14[%c2, %c0_13, %c0_14, %c0_15] : memref<3x4x8x8xbf16, #tpu.memory_space<vmem>>, vector<1x1x8x8xbf16>
    %20 = vector.shape_cast %19 : vector<1x1x8x8xbf16> to vector<8x8xbf16>
    %21 = vector.shape_cast %18 : vector<8x8xbf16> to vector<1x1x8x8xbf16>
    tpu.vector_store %arg14[%c2, %c0_13, %c0_14, %c0_15], %21 {strides = array<i32>} : memref<3x4x8x8xbf16, #tpu.memory_space<vmem>>, vector<1x1x8x8xbf16>,
    %22 = vector.extract_strided_slice %9 {offsets = [0, 8], sizes = [8, 8], strides = [1, 1]} : vector<8x96xbf16> to vector<8x8xbf16>
    %c0_16 = arith.constant 0 : index
    %c1_17 = arith.constant 1 : index
    %c0_18 = arith.constant 0 : index
    %c0_19 = arith.constant 0 : index
    %23 = vector.load %arg14[%c0_16, %c1_17, %c0_18, %c0_19] : memref<3x4x8x8xbf16, #tpu.memory_space<vmem>>, vector<1x1x8x8xbf16>
    %24 = vector.shape_cast %23 : vector<1x1x8x8xbf16> to vector<8x8xbf16>
    %25 = vector.shape_cast %22 : vector<8x8xbf16> to vector<1x1x8x8xbf16>
    tpu.vector_store %arg14[%c0_16, %c1_17, %c0_18, %c0_19], %25 {strides = array<i32>} : memref<3x4x8x8xbf16, #tpu.memory_space<vmem>>, vector<1x1x8x8xbf16>,
    %26 = vector.extract_strided_slice %9 {offsets = [0, 40], sizes = [8, 8], strides = [1, 1]} : vector<8x96xbf16> to vector<8x8xbf16>
    %c1_20 = arith.constant 1 : index
    %c1_21 = arith.constant 1 : index
    %c0_22 = arith.constant 0 : index
    %c0_23 = arith.constant 0 : index
    %27 = vector.load %arg14[%c1_20, %c1_21, %c0_22, %c0_23] : memref<3x4x8x8xbf16, #tpu.memory_space<vmem>>, vector<1x1x8x8xbf16>
    %28 = vector.shape_cast %27 : vector<1x1x8x8xbf16> to vector<8x8xbf16>
    %29 = vector.shape_cast %26 : vector<8x8xbf16> to vector<1x1x8x8xbf16>
    tpu.vector_store %arg14[%c1_20, %c1_21, %c0_22, %c0_23], %29 {strides = array<i32>} : memref<3x4x8x8xbf16, #tpu.memory_space<vmem>>, vector<1x1x8x8xbf16>,
    %30 = vector.extract_strided_slice %9 {offsets = [0, 72], sizes = [8, 8], strides = [1, 1]} : vector<8x96xbf16> to vector<8x8xbf16>
    %c2_24 = arith.constant 2 : index
    %c1_25 = arith.constant 1 : index
    %c0_26 = arith.constant 0 : index
    %c0_27 = arith.constant 0 : index
    %31 = vector.load %arg14[%c2_24, %c1_25, %c0_26, %c0_27] : memref<3x4x8x8xbf16, #tpu.memory_space<vmem>>, vector<1x1x8x8xbf16>
    %32 = vector.shape_cast %31 : vector<1x1x8x8xbf16> to vector<8x8xbf16>
    %33 = vector.shape_cast %30 : vector<8x8xbf16> to vector<1x1x8x8xbf16>
    tpu.vector_store %arg14[%c2_24, %c1_25, %c0_26, %c0_27], %33 {strides = array<i32>} : memref<3x4x8x8xbf16, #tpu.memory_space<vmem>>, vector<1x1x8x8xbf16>,
    %34 = vector.extract_strided_slice %9 {offsets = [0, 16], sizes = [8, 8], strides = [1, 1]} : vector<8x96xbf16> to vector<8x8xbf16>
    %c0_28 = arith.constant 0 : index
    %c2_29 = arith.constant 2 : index
    %c0_30 = arith.constant 0 : index
    %c0_31 = arith.constant 0 : index
    %35 = vector.load %arg14[%c0_28, %c2_29, %c0_30, %c0_31] : memref<3x4x8x8xbf16, #tpu.memory_space<vmem>>, vector<1x1x8x8xbf16>
    %36 = vector.shape_cast %35 : vector<1x1x8x8xbf16> to vector<8x8xbf16>
    %37 = vector.shape_cast %34 : vector<8x8xbf16> to vector<1x1x8x8xbf16>
    tpu.vector_store %arg14[%c0_28, %c2_29, %c0_30, %c0_31], %37 {strides = array<i32>} : memref<3x4x8x8xbf16, #tpu.memory_space<vmem>>, vector<1x1x8x8xbf16>,
    %38 = vector.extract_strided_slice %9 {offsets = [0, 48], sizes = [8, 8], strides = [1, 1]} : vector<8x96xbf16> to vector<8x8xbf16>
    %c1_32 = arith.constant 1 : index
    %c2_33 = arith.constant 2 : index
    %c0_34 = arith.constant 0 : index
    %c0_35 = arith.constant 0 : index
    %39 = vector.load %arg14[%c1_32, %c2_33, %c0_34, %c0_35] : memref<3x4x8x8xbf16, #tpu.memory_space<vmem>>, vector<1x1x8x8xbf16>
    %40 = vector.shape_cast %39 : vector<1x1x8x8xbf16> to vector<8x8xbf16>
    %41 = vector.shape_cast %38 : vector<8x8xbf16> to vector<1x1x8x8xbf16>
    tpu.vector_store %arg14[%c1_32, %c2_33, %c0_34, %c0_35], %41 {strides = array<i32>} : memref<3x4x8x8xbf16, #tpu.memory_space<vmem>>, vector<1x1x8x8xbf16>,
    %42 = vector.extract_strided_slice %9 {offsets = [0, 80], sizes = [8, 8], strides = [1, 1]} : vector<8x96xbf16> to vector<8x8xbf16>
    %c2_36 = arith.constant 2 : index
    %c2_37 = arith.constant 2 : index
    %c0_38 = arith.constant 0 : index
    %c0_39 = arith.constant 0 : index
    %43 = vector.load %arg14[%c2_36, %c2_37, %c0_38, %c0_39] : memref<3x4x8x8xbf16, #tpu.memory_space<vmem>>, vector<1x1x8x8xbf16>
    %44 = vector.shape_cast %43 : vector<1x1x8x8xbf16> to vector<8x8xbf16>
    %45 = vector.shape_cast %42 : vector<8x8xbf16> to vector<1x1x8x8xbf16>
    tpu.vector_store %arg14[%c2_36, %c2_37, %c0_38, %c0_39], %45 {strides = array<i32>} : memref<3x4x8x8xbf16, #tpu.memory_space<vmem>>, vector<1x1x8x8xbf16>,
    %46 = vector.extract_strided_slice %9 {offsets = [0, 24], sizes = [8, 8], strides = [1, 1]} : vector<8x96xbf16> to vector<8x8xbf16>
    %c0_40 = arith.constant 0 : index
    %c3 = arith.constant 3 : index
    %c0_41 = arith.constant 0 : index
    %c0_42 = arith.constant 0 : index
    %47 = vector.load %arg14[%c0_40, %c3, %c0_41, %c0_42] : memref<3x4x8x8xbf16, #tpu.memory_space<vmem>>, vector<1x1x8x8xbf16>
    %48 = vector.shape_cast %47 : vector<1x1x8x8xbf16> to vector<8x8xbf16>
    %49 = vector.shape_cast %46 : vector<8x8xbf16> to vector<1x1x8x8xbf16>
    tpu.vector_store %arg14[%c0_40, %c3, %c0_41, %c0_42], %49 {strides = array<i32>} : memref<3x4x8x8xbf16, #tpu.memory_space<vmem>>, vector<1x1x8x8xbf16>,
    %50 = vector.extract_strided_slice %9 {offsets = [0, 56], sizes = [8, 8], strides = [1, 1]} : vector<8x96xbf16> to vector<8x8xbf16>
    %c1_43 = arith.constant 1 : index
    %c3_44 = arith.constant 3 : index
    %c0_45 = arith.constant 0 : index
    %c0_46 = arith.constant 0 : index
    %51 = vector.load %arg14[%c1_43, %c3_44, %c0_45, %c0_46] : memref<3x4x8x8xbf16, #tpu.memory_space<vmem>>, vector<1x1x8x8xbf16>
    %52 = vector.shape_cast %51 : vector<1x1x8x8xbf16> to vector<8x8xbf16>
    %53 = vector.shape_cast %50 : vector<8x8xbf16> to vector<1x1x8x8xbf16>
    tpu.vector_store %arg14[%c1_43, %c3_44, %c0_45, %c0_46], %53 {strides = array<i32>} : memref<3x4x8x8xbf16, #tpu.memory_space<vmem>>, vector<1x1x8x8xbf16>,
    %54 = vector.extract_strided_slice %9 {offsets = [0, 88], sizes = [8, 8], strides = [1, 1]} : vector<8x96xbf16> to vector<8x8xbf16>
    %c2_47 = arith.constant 2 : index
    %c3_48 = arith.constant 3 : index
    %c0_49 = arith.constant 0 : index
    %c0_50 = arith.constant 0 : index
    %55 = vector.load %arg14[%c2_47, %c3_48, %c0_49, %c0_50] : memref<3x4x8x8xbf16, #tpu.memory_space<vmem>>, vector<1x1x8x8xbf16>
    %56 = vector.shape_cast %55 : vector<1x1x8x8xbf16> to vector<8x8xbf16>
    %57 = vector.shape_cast %54 : vector<8x8xbf16> to vector<1x1x8x8xbf16>
    tpu.vector_store %arg14[%c2_47, %c3_48, %c0_49, %c0_50], %57 {strides = array<i32>} : memref<3x4x8x8xbf16, #tpu.memory_space<vmem>>, vector<1x1x8x8xbf16>,
    %c0_51 = arith.constant 0 : index
    %c0_52 = arith.constant 0 : index
    %c0_53 = arith.constant 0 : index
    %c0_54 = arith.constant 0 : index
    %58 = vector.load %arg14[%c0_51, %c0_52, %c0_53, %c0_54] : memref<3x4x8x8xbf16, #tpu.memory_space<vmem>>, vector<1x4x8x8xbf16>
    %59 = vector.shape_cast %58 : vector<1x4x8x8xbf16> to vector<4x8x8xbf16>
    %c1_55 = arith.constant 1 : index
    %c0_56 = arith.constant 0 : index
    %c0_57 = arith.constant 0 : index
    %c0_58 = arith.constant 0 : index
    %60 = vector.load %arg14[%c1_55, %c0_56, %c0_57, %c0_58] : memref<3x4x8x8xbf16, #tpu.memory_space<vmem>>, vector<1x4x8x8xbf16>
    %61 = vector.shape_cast %60 : vector<1x4x8x8xbf16> to vector<4x8x8xbf16>
    %c2_59 = arith.constant 2 : index
    %c0_60 = arith.constant 0 : index
    %c0_61 = arith.constant 0 : index
    %c0_62 = arith.constant 0 : index
    %62 = vector.load %arg14[%c2_59, %c0_60, %c0_61, %c0_62] : memref<3x4x8x8xbf16, #tpu.memory_space<vmem>>, vector<1x4x8x8xbf16>
    %63 = vector.shape_cast %62 : vector<1x4x8x8xbf16> to vector<4x8x8xbf16>
    %cst_63 = arith.constant dense<0.000000e+00> : vector<4x8x8xf32>
    %64 = tpu.matmul %59, %61, %cst_63 {dimension_numbers = #tpu.dot_dimension_numbers<[2], [2], [1], [1], [0, 0, 0, 1, 1, 1], [0], [0]>} : vector<4x8x8xbf16>, vector<4x8x8xbf16>, vector<4x8x8xf32> -> vector<4x8x8xf32>
    %c0_64 = arith.constant 0 : index
    %c0_65 = arith.constant 0 : index
    %65 = vector.load %arg15[%c0_64, %c0_65] : memref<8x8xf32, #tpu.memory_space<vmem>>, vector<8x8xf32>
    %cst_66 = arith.constant 0.000000e+00 : f32
    %66 = vector.broadcast %cst_66 : f32 to vector<8x8xf32>
    %67 = arith.cmpf ogt, %65, %66 : vector<8x8xf32>
    %cst_67 = arith.constant -1.000000e+09 : f32
    %68 = vector.shape_cast %67 : vector<8x8xi1> to vector<1x8x8xi1>
    %69 = vector.broadcast %68 : vector<1x8x8xi1> to vector<4x8x8xi1>
    %70 = vector.broadcast %cst_67 : f32 to vector<4x8x8xf32>
    %71 = arith.select %69, %70, %64 : vector<4x8x8xi1>, vector<4x8x8xf32>
    %cst_68 = arith.constant dense<0xFF800000> : vector<4x8xf32>
    %72 = vector.multi_reduction <maximumf>, %71, %cst_68 [2] : vector<4x8x8xf32> to vector<4x8xf32>
    %73 = vector.shape_cast %72 : vector<4x8xf32> to vector<4x8x1xf32>
    %74 = vector.broadcast %73 : vector<4x8x1xf32> to vector<4x8x8xf32>
    %75 = arith.subf %71, %74 : vector<4x8x8xf32>
    %76 = math.exp %75 : vector<4x8x8xf32>
    %cst_69 = arith.constant dense<0.000000e+00> : vector<4x8xf32>
    %77 = vector.multi_reduction <add>, %76, %cst_69 [2] : vector<4x8x8xf32> to vector<4x8xf32>
    %78 = vector.shape_cast %77 : vector<4x8xf32> to vector<4x8x1xf32>
    %79 = tpu.reciprocal %78 {approx = true} : vector<4x8x1xf32> -> vector<4x8x1xf32>
    %80 = vector.broadcast %79 : vector<4x8x1xf32> to vector<4x8x8xf32>
    %81 = arith.mulf %76, %80 : vector<4x8x8xf32>
    %82 = arith.truncf %81 : vector<4x8x8xf32> to vector<4x8x8xbf16>
    %c0_70 = arith.constant 0 : index
    %c0_71 = arith.constant 0 : index
    %c0_72 = arith.constant 0 : index
    %c0_73 = arith.constant 0 : index
    %c0_74 = arith.constant 0 : index
    %83 = vector.load %arg13[%c0_70, %c0_71, %c0_72, %c0_73, %c0_74] : memref<1x1x4x8x8xbf16, #tpu.memory_space<vmem>>, vector<1x1x4x8x8xbf16>
    %84 = vector.shape_cast %83 : vector<1x1x4x8x8xbf16> to vector<4x8x8xbf16>
    %85 = vector.shape_cast %82 : vector<4x8x8xbf16> to vector<1x1x4x8x8xbf16>
    tpu.vector_store %arg13[%c0_70, %c0_71, %c0_72, %c0_73, %c0_74], %85 {strides = array<i32>} : memref<1x1x4x8x8xbf16, #tpu.memory_space<vmem>>, vector<1x1x4x8x8xbf16>,
    %cst_75 = arith.constant dense<0.000000e+00> : vector<4x8x8xf32>
    %86 = tpu.matmul %82, %63, %cst_75 {dimension_numbers = #tpu.dot_dimension_numbers<[2], [1], [1], [2], [0, 0, 0, 1, 1, 2], [0], [0]>} : vector<4x8x8xbf16>, vector<4x8x8xbf16>, vector<4x8x8xf32> -> vector<4x8x8xf32>
    %87 = arith.truncf %86 : vector<4x8x8xf32> to vector<4x8x8xbf16>
    %c0_76 = arith.constant 0 : index
    %c0_77 = arith.constant 0 : index
    %c0_78 = arith.constant 0 : index
    %c0_79 = arith.constant 0 : index
    %88 = vector.load %arg5[%c0_76, %c0_77, %c0_78, %c0_79] : memref<1x4x8x32xbf16, #tpu.memory_space<vmem>>, vector<1x4x8x32xbf16>
    %89 = vector.shape_cast %88 : vector<1x4x8x32xbf16> to vector<4x8x32xbf16>
    %cst_80 = arith.constant dense<0.000000e+00> : vector<4x8x32xf32>
    %90 = tpu.matmul %87, %89, %cst_80 {dimension_numbers = #tpu.dot_dimension_numbers<[2], [1], [1], [2], [0, 0, 0, 1, 1, 2], [0], [0]>} : vector<4x8x8xbf16>, vector<4x8x32xbf16>, vector<4x8x32xf32> -> vector<4x8x32xf32>
    %cst_81 = arith.constant dense<0.000000e+00> : vector<8x32xf32>
    %91 = vector.multi_reduction <add>, %90, %cst_81 [0] : vector<4x8x32xf32> to vector<8x32xf32>
    %92 = arith.addf %91, %4 : vector<8x32xf32>
    %cst_82 = arith.constant dense<0.000000e+00> : vector<8xf32>
    %93 = vector.multi_reduction <add>, %92, %cst_82 [1] : vector<8x32xf32> to vector<8xf32>
    %94 = vector.shape_cast %93 : vector<8xf32> to vector<8x1xf32>
    %cst_83 = arith.constant 3.200000e+01 : f32
    %95 = vector.broadcast %cst_83 : f32 to vector<8x1xf32>
    %96 = arith.divf %94, %95 : vector<8x1xf32>
    %97 = vector.broadcast %96 : vector<8x1xf32> to vector<8x32xf32>
    %98 = arith.subf %92, %97 : vector<8x32xf32>
    %99 = arith.mulf %98, %98 : vector<8x32xf32>
    %cst_84 = arith.constant dense<0.000000e+00> : vector<8xf32>
    %100 = vector.multi_reduction <add>, %99, %cst_84 [1] : vector<8x32xf32> to vector<8xf32>
    %101 = vector.shape_cast %100 : vector<8xf32> to vector<8x1xf32>
    %cst_85 = arith.constant 3.200000e+01 : f32
    %102 = vector.broadcast %cst_85 : f32 to vector<8x1xf32>
    %103 = arith.divf %101, %102 : vector<8x1xf32>
    %104 = vector.broadcast %96 : vector<8x1xf32> to vector<8x32xf32>
    %105 = arith.subf %92, %104 : vector<8x32xf32>
    %cst_86 = arith.constant 9.99999974E-6 : f32
    %106 = vector.broadcast %cst_86 : f32 to vector<8x1xf32>
    %107 = arith.addf %103, %106 : vector<8x1xf32>
    %108 = math.rsqrt %107 : vector<8x1xf32>
    %109 = vector.broadcast %108 : vector<8x1xf32> to vector<8x32xf32>
    %110 = arith.mulf %105, %109 : vector<8x32xf32>
    %c0_87 = arith.constant 0 : index
    %c0_88 = arith.constant 0 : index
    %c0_89 = arith.constant 0 : index
    %111 = vector.load %arg6[%c0_87, %c0_88, %c0_89] : memref<1x1x32xf32, #tpu.memory_space<vmem>>, vector<1x1x32xf32>
    %112 = vector.shape_cast %111 : vector<1x1x32xf32> to vector<1x32xf32>
    %113 = vector.broadcast %112 : vector<1x32xf32> to vector<8x32xf32>
    %114 = arith.mulf %110, %113 : vector<8x32xf32>
    %c0_90 = arith.constant 0 : index
    %c0_91 = arith.constant 0 : index
    %c0_92 = arith.constant 0 : index
    %115 = vector.load %arg7[%c0_90, %c0_91, %c0_92] : memref<1x1x32xf32, #tpu.memory_space<vmem>>, vector<1x1x32xf32>
    %116 = vector.shape_cast %115 : vector<1x1x32xf32> to vector<1x32xf32>
    %117 = vector.broadcast %116 : vector<1x32xf32> to vector<8x32xf32>
    %118 = arith.addf %114, %117 : vector<8x32xf32>
    %119 = arith.truncf %118 : vector<8x32xf32> to vector<8x32xbf16>
    %c0_93 = arith.constant 0 : index
    %c0_94 = arith.constant 0 : index
    %c0_95 = arith.constant 0 : index
    %120 = vector.load %arg8[%c0_93, %c0_94, %c0_95] : memref<1x32x64xbf16, #tpu.memory_space<vmem>>, vector<1x32x64xbf16>
    %121 = vector.shape_cast %120 : vector<1x32x64xbf16> to vector<32x64xbf16>
    %cst_96 = arith.constant dense<0.000000e+00> : vector<8x64xf32>
    %122 = tpu.matmul %119, %121, %cst_96 {dimension_numbers = #tpu.dot_dimension_numbers<[1], [0], [0], [1], [0, 0, 1, 1], [], []>} : vector<8x32xbf16>, vector<32x64xbf16>, vector<8x64xf32> -> vector<8x64xf32>
    %cst_97 = arith.constant 0.000000e+00 : f32
    %123 = vector.broadcast %cst_97 : f32 to vector<8x64xf32>
    %124 = arith.maximumf %122, %123 : vector<8x64xf32>
    %125 = arith.truncf %124 : vector<8x64xf32> to vector<8x64xbf16>
    %c0_98 = arith.constant 0 : index
    %c0_99 = arith.constant 0 : index
    %c0_100 = arith.constant 0 : index
    %126 = vector.load %arg9[%c0_98, %c0_99, %c0_100] : memref<1x64x32xbf16, #tpu.memory_space<vmem>>, vector<1x64x32xbf16>
    %127 = vector.shape_cast %126 : vector<1x64x32xbf16> to vector<64x32xbf16>
    %cst_101 = arith.constant dense<0.000000e+00> : vector<8x32xf32>
    %128 = tpu.matmul %125, %127, %cst_101 {dimension_numbers = #tpu.dot_dimension_numbers<[1], [0], [0], [1], [0, 0, 1, 1], [], []>} : vector<8x64xbf16>, vector<64x32xbf16>, vector<8x32xf32> -> vector<8x32xf32>
    %129 = arith.addf %128, %118 : vector<8x32xf32>
    %cst_102 = arith.constant dense<0.000000e+00> : vector<8xf32>
    %130 = vector.multi_reduction <add>, %129, %cst_102 [1] : vector<8x32xf32> to vector<8xf32>
    %131 = vector.shape_cast %130 : vector<8xf32> to vector<8x1xf32>
    %cst_103 = arith.constant 3.200000e+01 : f32
    %132 = vector.broadcast %cst_103 : f32 to vector<8x1xf32>
    %133 = arith.divf %131, %132 : vector<8x1xf32>
    %134 = vector.broadcast %133 : vector<8x1xf32> to vector<8x32xf32>
    %135 = arith.subf %129, %134 : vector<8x32xf32>
    %136 = arith.mulf %135, %135 : vector<8x32xf32>
    %cst_104 = arith.constant dense<0.000000e+00> : vector<8xf32>
    %137 = vector.multi_reduction <add>, %136, %cst_104 [1] : vector<8x32xf32> to vector<8xf32>
    %138 = vector.shape_cast %137 : vector<8xf32> to vector<8x1xf32>
    %cst_105 = arith.constant 3.200000e+01 : f32
    %139 = vector.broadcast %cst_105 : f32 to vector<8x1xf32>
    %140 = arith.divf %138, %139 : vector<8x1xf32>
    %141 = vector.broadcast %133 : vector<8x1xf32> to vector<8x32xf32>
    %142 = arith.subf %129, %141 : vector<8x32xf32>
    %cst_106 = arith.constant 9.99999974E-6 : f32
    %143 = vector.broadcast %cst_106 : f32 to vector<8x1xf32>
    %144 = arith.addf %140, %143 : vector<8x1xf32>
    %145 = math.rsqrt %144 : vector<8x1xf32>
    %146 = vector.broadcast %145 : vector<8x1xf32> to vector<8x32xf32>
    %147 = arith.mulf %142, %146 : vector<8x32xf32>
    %c0_107 = arith.constant 0 : index
    %c0_108 = arith.constant 0 : index
    %c0_109 = arith.constant 0 : index
    %148 = vector.load %arg10[%c0_107, %c0_108, %c0_109] : memref<1x1x32xf32, #tpu.memory_space<vmem>>, vector<1x1x32xf32>
    %149 = vector.shape_cast %148 : vector<1x1x32xf32> to vector<1x32xf32>
    %150 = vector.broadcast %149 : vector<1x32xf32> to vector<8x32xf32>
    %151 = arith.mulf %147, %150 : vector<8x32xf32>
    %c0_110 = arith.constant 0 : index
    %c0_111 = arith.constant 0 : index
    %c0_112 = arith.constant 0 : index
    %152 = vector.load %arg11[%c0_110, %c0_111, %c0_112] : memref<1x1x32xf32, #tpu.memory_space<vmem>>, vector<1x1x32xf32>
    %153 = vector.shape_cast %152 : vector<1x1x32xf32> to vector<1x32xf32>
    %154 = vector.broadcast %153 : vector<1x32xf32> to vector<8x32xf32>
    %155 = arith.addf %151, %154 : vector<8x32xf32>
    %c0_113 = arith.constant 0 : index
    %c0_114 = arith.constant 0 : index
    %c0_115 = arith.constant 0 : index
    %156 = vector.load %arg12[%c0_113, %c0_114, %c0_115] : memref<1x8x32xf32, #tpu.memory_space<vmem>>, vector<1x8x32xf32>
    %157 = vector.shape_cast %156 : vector<1x8x32xf32> to vector<8x32xf32>
    %158 = vector.shape_cast %155 : vector<8x32xf32> to vector<1x8x32xf32>
    tpu.vector_store %arg12[%c0_113, %c0_114, %c0_115], %158 {strides = array<i32>} : memref<1x8x32xf32, #tpu.memory_space<vmem>>, vector<1x8x32xf32>,
    return
  }
  func.func @transform_0(%arg0: i32, %arg1: i32) -> (i32, i32, i32) {
    %c0_i32 = arith.constant 0 : i32
    %c0_i32_0 = arith.constant 0 : i32
    %c0_i32_1 = arith.constant 0 : i32
    return %arg0, %c0_i32, %c0_i32_0 : i32, i32, i32
  }
  func.func @transform_1(%arg0: i32, %arg1: i32) -> (i32, i32, i32) {
    %c0_i32 = arith.constant 0 : i32
    %c0_i32_0 = arith.constant 0 : i32
    %c0_i32_1 = arith.constant 0 : i32
    return %arg0, %c0_i32, %c0_i32_0 : i32, i32, i32
  }
  func.func @transform_2(%arg0: i32, %arg1: i32) -> (i32, i32, i32) {
    %c0_i32 = arith.constant 0 : i32
    %c0_i32_0 = arith.constant 0 : i32
    %c0_i32_1 = arith.constant 0 : i32
    return %arg1, %c0_i32, %c0_i32_0 : i32, i32, i32
  }
  func.func @transform_3(%arg0: i32, %arg1: i32) -> (i32, i32, i32, i32) {
    %c0_i32 = arith.constant 0 : i32
    %c0_i32_0 = arith.constant 0 : i32
    %c0_i32_1 = arith.constant 0 : i32
    %c0_i32_2 = arith.constant 0 : i32
    return %arg1, %c0_i32, %c0_i32_0, %c0_i32_1 : i32, i32, i32, i32
  }
  func.func @transform_4(%arg0: i32, %arg1: i32) -> (i32, i32, i32) {
    %c0_i32 = arith.constant 0 : i32
    %c0_i32_0 = arith.constant 0 : i32
    %c0_i32_1 = arith.constant 0 : i32
    return %arg1, %c0_i32, %c0_i32_0 : i32, i32, i32
  }
  func.func @transform_5(%arg0: i32, %arg1: i32) -> (i32, i32, i32) {
    %c0_i32 = arith.constant 0 : i32
    %c0_i32_0 = arith.constant 0 : i32
    %c0_i32_1 = arith.constant 0 : i32
    return %arg1, %c0_i32, %c0_i32_0 : i32, i32, i32
  }
  func.func @transform_6(%arg0: i32, %arg1: i32) -> (i32, i32, i32) {
    %c0_i32 = arith.constant 0 : i32
    %c0_i32_0 = arith.constant 0 : i32
    %c0_i32_1 = arith.constant 0 : i32
    return %arg1, %c0_i32, %c0_i32_0 : i32, i32, i32
  }
  func.func @transform_7(%arg0: i32, %arg1: i32) -> (i32, i32, i32) {
    %c0_i32 = arith.constant 0 : i32
    %c0_i32_0 = arith.constant 0 : i32
    %c0_i32_1 = arith.constant 0 : i32
    return %arg1, %c0_i32, %c0_i32_0 : i32, i32, i32
  }
  func.func @transform_8(%arg0: i32, %arg1: i32) -> (i32, i32, i32) {
    %c0_i32 = arith.constant 0 : i32
    %c0_i32_0 = arith.constant 0 : i32
    %c0_i32_1 = arith.constant 0 : i32
    return %arg1, %c0_i32, %c0_i32_0 : i32, i32, i32
  }
  func.func @transform_9(%arg0: i32, %arg1: i32) -> (i32, i32, i32) {
    %c0_i32 = arith.constant 0 : i32
    %c0_i32_0 = arith.constant 0 : i32
    %c0_i32_1 = arith.constant 0 : i32
    return %arg1, %c0_i32, %c0_i32_0 : i32, i32, i32
  }
  func.func @transform_10(%arg0: i32, %arg1: i32) -> (i32, i32, i32) {
    %c0_i32 = arith.constant 0 : i32
    %c0_i32_0 = arith.constant 0 : i32
    %c0_i32_1 = arith.constant 0 : i32
    return %arg0, %c0_i32, %c0_i32_0 : i32, i32, i32
  }
  func.func @transform_11(%arg0: i32, %arg1: i32) -> (i32, i32, i32, i32, i32) {
    %c0_i32 = arith.constant 0 : i32
    %c0_i32_0 = arith.constant 0 : i32
    %c0_i32_1 = arith.constant 0 : i32
    %c0_i32_2 = arith.constant 0 : i32
    return %arg1, %arg0, %c0_i32, %c0_i32_0, %c0_i32_1 : i32, i32, i32, i32, i32
  }
}

</mosaic_0001>

<llo_original>
// kernel: decoder_forward.1
$region0: #{decoder_forward.1}
  #allocation0 [shape = 'u32[]', space=smem, size = 0x4, offset = 0x4, fixed_abs, tag = 'smem constant byte address 0x4 - core index']
  #allocation1 [shape = 'u32[72,128]{1,0:T(1,128)}', space=vmem, size = 0x9000, scoped, tag = 'internal scratch']
  #allocation2 [shape = 'bf16[3,4,8,8]{3,2,1,0:T(8,128)(2,1)}', space=vmem, size = 0x6000, scoped, tag = 'scratch operand']
  #allocation3 [shape = 'f32[8,8]{1,0:T(8,128)}', space=vmem, size = 0x1000, scoped, tag = 'scratch operand']
  %s0 = inlined_call_operand.vmem [shape: f32[2,8,32], index: 0, kind: input, shape index: {}]
  %s1 = inlined_call_operand.vmem [shape: f32[2,1,8], index: 1, kind: input, shape index: {}]
  %s2 = inlined_call_operand.vmem [shape: bf16[2,32,96], index: 2, kind: input, shape index: {}]
  %s3 = inlined_call_operand.vmem [shape: bf16[2,4,8,32], index: 3, kind: input, shape index: {}]
  %s4 = inlined_call_operand.vmem [shape: f32[2,1,32], index: 4, kind: input, shape index: {}]
  %s5 = inlined_call_operand.vmem [shape: f32[2,1,32], index: 5, kind: input, shape index: {}]
  %s6 = inlined_call_operand.vmem [shape: bf16[2,32,64], index: 6, kind: input, shape index: {}]
  %s7 = inlined_call_operand.vmem [shape: bf16[2,64,32], index: 7, kind: input, shape index: {}]
  %s8 = inlined_call_operand.vmem [shape: f32[2,1,32], index: 8, kind: input, shape index: {}]
  %s9 = inlined_call_operand.vmem [shape: f32[2,1,32], index: 9, kind: input, shape index: {}]
  %s10 = inlined_call_operand.hbm [shape: f32[2,8,32], index: 10, kind: output, shape index: {0}]
  %s11 = inlined_call_operand.vmem [shape: bf16[2,2,4,8,8], index: 11, kind: output, shape index: {1}]
  %12 = xla_tuple %s10, %s11
  %s13 = sld [smem:[#allocation0]]
  $region85: #{decoder_forward.1} parent=0
    _
  %s15 = ssub.s32 1, %s13
  %s16 = scalar_select 0, %s15, %s13
  $region1: #{decoder_forward.1} parent=0
    #allocation4 [shape = 'u8[8192]{0}', space=vmem, size = 0x2000, scoped, tag = 'output window, operand 0']
    #allocation5 [shape = 's32[2]{0}', space=sflag, size = 0x8, scoped, tag = 'scoped memory for decoder_forward.1']
    %17 = vsyncpa [#allocation5], 0
    %s18 = scalar_lea.sflag [#allocation5], 1
    %19 = vsyncpa %s18, 0
    loop: start=0, step=1, limit=6
    $region2: #{decoder_forward.1} parent=1 // loop_pre_header
      _
    $region3: #{decoder_forward.1} parent=1 // loop_header
      %s21 = sphi 0, %s25
      %p22 = scmp.ge.s32.totalorder %s21, 6
      %s28 = sphi 0, %s40
      %s29 = sphi 0, %s36
      %s30 = sphi 0, %s28
      %s31 = sphi 0, %s29
      %s32 = sphi 0, %s30
      %s33 = sphi 0, %s31
      %s43 = sphi 0, %s45
      %s46 = sphi 0, %s43
      %s47 = sphi 0, %s46
      %s63 = sphi 0, %s47
      %s69 = sphi 0, %s71
      %s72 = sphi 0, %s69
      %s73 = sphi 0, %s72
      %s89 = sphi 0, %s73
      %s95 = sphi 0, %s97
      %s98 = sphi 0, %s95
      %s99 = sphi 0, %s98
      %s115 = sphi 0, %s99
      %s121 = sphi 0, %s123
      %s124 = sphi 0, %s121
      %s125 = sphi 0, %s124
      %s141 = sphi 0, %s125
      %s147 = sphi 0, %s149
      %s150 = sphi 0, %s147
      %s151 = sphi 0, %s150
      %s167 = sphi 0, %s151
      %s173 = sphi 0, %s175
      %s176 = sphi 0, %s173
      %s177 = sphi 0, %s176
      %s193 = sphi 0, %s177
      %s199 = sphi 0, %s201
      %s202 = sphi 0, %s199
      %s203 = sphi 0, %s202
      %s219 = sphi 0, %s203
      %s225 = sphi 0, %s227
      %s228 = sphi 0, %s225
      %s229 = sphi 0, %s228
      %s245 = sphi 0, %s229
      %s251 = sphi 0, %s253
      %s254 = sphi 0, %s251
      %s255 = sphi 0, %s254
      %s271 = sphi 0, %s255
      %s277 = sphi 0, %s279
      %s280 = sphi 0, %s277
      %s281 = sphi 0, %s280
      %s297 = sphi 0, %s281
      %s303 = sphi 0, %s305
      %s306 = sphi 0, %s303
      %s307 = sphi 0, %s306
      %s323 = sphi 0, %s307
      %s331 = sphi 0, %s333
      %s334 = sphi 0, %s331
      %s335 = sphi 0, %s334
      %s351 = sphi 0, %s335
    $region4: #{decoder_forward.1} parent=1 // loop_header_branch
      %24 = sbr.rel (%p22) target = $region8
    $region5: #{decoder_forward.1} parent=1 // loop_body
      %s26 = ssub.s32 %s21, 1
      %s27 = ssub.s32 %s21, 2
      %s34 = sadd.s32 1, %s29
      %p35 = scmp.ge.s32.totalorder %s34, 2
      %s36 = scalar_select %p35, 0, %s34
      %s37 = sadd.s32 1, %s28
      %s38 = scalar_select %p35, %s37, %s28
      %p39 = scmp.ge.s32.totalorder %s38, 2
      %s40 = scalar_select %p39, 0, %s38
      %s41 = ssub.s32 %s28, %s40
      %p42 = scmp.eq.s32.totalorder %s41, 0
      %s44 = sadd.s32 %s43, 1
      %s45 = scalar_select %p42, %s43, %s44
      %p48 = pneg %p42
      %p49 = scmp.eq.s32.totalorder %s21, 3
      %p50 = por %p48, %p49
      %p51 = scmp.ne.s32.totalorder %s43, %s46
      %p52 = scmp.eq.s32.totalorder %s21, 0
      %p53 = por %p51, %p52
      %p54 = scmp.ne.s32.totalorder %s43, %s46
      %p55 = scmp.eq.s32.totalorder %s26, 3
      %p56 = por %p54, %p55
      %p57 = scmp.ne.s32.totalorder %s46, %s47
      %p58 = scmp.eq.s32.totalorder %s26, 0
      %p59 = por %p57, %p58
      %p60 = scmp.ne.s32.totalorder %s46, %s47
      %p61 = scmp.eq.s32.totalorder %s27, 3
      %p62 = por %p60, %p61
      %p64 = scmp.ne.s32.totalorder %s47, %s63
      %p65 = scmp.eq.s32.totalorder %s27, 0
      %p66 = por %p64, %p65
      %s67 = ssub.s32 %s28, %s40
      %p68 = scmp.eq.s32.totalorder %s67, 0
      %s70 = sadd.s32 %s69, 1
      %s71 = scalar_select %p68, %s69, %s70
      %p74 = pneg %p68
      %p75 = scmp.eq.s32.totalorder %s21, 3
      %p76 = por %p74, %p75
      %p77 = scmp.ne.s32.totalorder %s69, %s72
      %p78 = scmp.eq.s32.totalorder %s21, 0
      %p79 = por %p77, %p78
      %p80 = scmp.ne.s32.totalorder %s69, %s72
      %p81 = scmp.eq.s32.totalorder %s26, 3
      %p82 = por %p80, %p81
      %p83 = scmp.ne.s32.totalorder %s72, %s73
      %p84 = scmp.eq.s32.totalorder %s26, 0
      %p85 = por %p83, %p84
      %p86 = scmp.ne.s32.totalorder %s72, %s73
      %p87 = scmp.eq.s32.totalorder %s27, 3
      %p88 = por %p86, %p87
      %p90 = scmp.ne.s32.totalorder %s73, %s89
      %p91 = scmp.eq.s32.totalorder %s27, 0
      %p92 = por %p90, %p91
      %s93 = ssub.s32 %s29, %s36
      %p94 = scmp.eq.s32.totalorder %s93, 0
      %s96 = sadd.s32 %s95, 1
      %s97 = scalar_select %p94, %s95, %s96
      %p100 = pneg %p94
      %p101 = scmp.eq.s32.totalorder %s21, 3
      %p102 = por %p100, %p101
      %p103 = scmp.ne.s32.totalorder %s95, %s98
      %p104 = scmp.eq.s32.totalorder %s21, 0
      %p105 = por %p103, %p104
      %p106 = scmp.ne.s32.totalorder %s95, %s98
      %p107 = scmp.eq.s32.totalorder %s26, 3
      %p108 = por %p106, %p107
      %p109 = scmp.ne.s32.totalorder %s98, %s99
      %p110 = scmp.eq.s32.totalorder %s26, 0
      %p111 = por %p109, %p110
      %p112 = scmp.ne.s32.totalorder %s98, %s99
      %p113 = scmp.eq.s32.totalorder %s27, 3
      %p114 = por %p112, %p113
      %p116 = scmp.ne.s32.totalorder %s99, %s115
      %p117 = scmp.eq.s32.totalorder %s27, 0
      %p118 = por %p116, %p117
      %s119 = ssub.s32 %s29, %s36
      %p120 = scmp.eq.s32.totalorder %s119, 0
      %s122 = sadd.s32 %s121, 1
      %s123 = scalar_select %p120, %s121, %s122
      %p126 = pneg %p120
      %p127 = scmp.eq.s32.totalorder %s21, 3
      %p128 = por %p126, %p127
      %p129 = scmp.ne.s32.totalorder %s121, %s124
      %p130 = scmp.eq.s32.totalorder %s21, 0
      %p131 = por %p129, %p130
      %p132 = scmp.ne.s32.totalorder %s121, %s124
      %p133 = scmp.eq.s32.totalorder %s26, 3
      %p134 = por %p132, %p133
      %p135 = scmp.ne.s32.totalorder %s124, %s125
      %p136 = scmp.eq.s32.totalorder %s26, 0
      %p137 = por %p135, %p136
      %p138 = scmp.ne.s32.totalorder %s124, %s125
      %p139 = scmp.eq.s32.totalorder %s27, 3
      %p140 = por %p138, %p139
      %p142 = scmp.ne.s32.totalorder %s125, %s141
      %p143 = scmp.eq.s32.totalorder %s27, 0
      %p144 = por %p142, %p143
      %s145 = ssub.s32 %s29, %s36
      %p146 = scmp.eq.s32.totalorder %s145, 0
      %s148 = sadd.s32 %s147, 1
      %s149 = scalar_select %p146, %s147, %s148
      %p152 = pneg %p146
      %p153 = scmp.eq.s32.totalorder %s21, 3
      %p154 = por %p152, %p153
      %p155 = scmp.ne.s32.totalorder %s147, %s150
      %p156 = scmp.eq.s32.totalorder %s21, 0
      %p157 = por %p155, %p156
      %p158 = scmp.ne.s32.totalorder %s147, %s150
      %p159 = scmp.eq.s32.totalorder %s26, 3
      %p160 = por %p158, %p159
      %p161 = scmp.ne.s32.totalorder %s150, %s151
      %p162 = scmp.eq.s32.totalorder %s26, 0
      %p163 = por %p161, %p162
      %p164 = scmp.ne.s32.totalorder %s150, %s151
      %p165 = scmp.eq.s32.totalorder %s27, 3
      %p166 = por %p164, %p165
      %p168 = scmp.ne.s32.totalorder %s151, %s167
      %p169 = scmp.eq.s32.totalorder %s27, 0
      %p170 = por %p168, %p169
      %s171 = ssub.s32 %s29, %s36
      %p172 = scmp.eq.s32.totalorder %s171, 0
      %s174 = sadd.s32 %s173, 1
      %s175 = scalar_select %p172, %s173, %s174
      %p178 = pneg %p172
      %p179 = scmp.eq.s32.totalorder %s21, 3
      %p180 = por %p178, %p179
      %p181 = scmp.ne.s32.totalorder %s173, %s176
      %p182 = scmp.eq.s32.totalorder %s21, 0
      %p183 = por %p181, %p182
      %p184 = scmp.ne.s32.totalorder %s173, %s176
      %p185 = scmp.eq.s32.totalorder %s26, 3
      %p186 = por %p184, %p185
      %p187 = scmp.ne.s32.totalorder %s176, %s177
      %p188 = scmp.eq.s32.totalorder %s26, 0
      %p189 = por %p187, %p188
      %p190 = scmp.ne.s32.totalorder %s176, %s177
      %p191 = scmp.eq.s32.totalorder %s27, 3
      %p192 = por %p190, %p191
      %p194 = scmp.ne.s32.totalorder %s177, %s193
      %p195 = scmp.eq.s32.totalorder %s27, 0
      %p196 = por %p194, %p195
      %s197 = ssub.s32 %s29, %s36
      %p198 = scmp.eq.s32.totalorder %s197, 0
      %s200 = sadd.s32 %s199, 1
      %s201 = scalar_select %p198, %s199, %s200
      %p204 = pneg %p198
      %p205 = scmp.eq.s32.totalorder %s21, 3
      %p206 = por %p204, %p205
      %p207 = scmp.ne.s32.totalorder %s199, %s202
      %p208 = scmp.eq.s32.totalorder %s21, 0
      %p209 = por %p207, %p208
      %p210 = scmp.ne.s32.totalorder %s199, %s202
      %p211 = scmp.eq.s32.totalorder %s26, 3
      %p212 = por %p210, %p211
      %p213 = scmp.ne.s32.totalorder %s202, %s203
      %p214 = scmp.eq.s32.totalorder %s26, 0
      %p215 = por %p213, %p214
      %p216 = scmp.ne.s32.totalorder %s202, %s203
      %p217 = scmp.eq.s32.totalorder %s27, 3
      %p218 = por %p216, %p217
      %p220 = scmp.ne.s32.totalorder %s203, %s219
      %p221 = scmp.eq.s32.totalorder %s27, 0
      %p222 = por %p220, %p221
      %s223 = ssub.s32 %s29, %s36
      %p224 = scmp.eq.s32.totalorder %s223, 0
      %s226 = sadd.s32 %s225, 1
      %s227 = scalar_select %p224, %s225, %s226
      %p230 = pneg %p224
      %p231 = scmp.eq.s32.totalorder %s21, 3
      %p232 = por %p230, %p231
      %p233 = scmp.ne.s32.totalorder %s225, %s228
      %p234 = scmp.eq.s32.totalorder %s21, 0
      %p235 = por %p233, %p234
      %p236 = scmp.ne.s32.totalorder %s225, %s228
      %p237 = scmp.eq.s32.totalorder %s26, 3
      %p238 = por %p236, %p237
      %p239 = scmp.ne.s32.totalorder %s228, %s229
      %p240 = scmp.eq.s32.totalorder %s26, 0
      %p241 = por %p239, %p240
      %p242 = scmp.ne.s32.totalorder %s228, %s229
      %p243 = scmp.eq.s32.totalorder %s27, 3
      %p244 = por %p242, %p243
      %p246 = scmp.ne.s32.totalorder %s229, %s245
      %p247 = scmp.eq.s32.totalorder %s27, 0
      %p248 = por %p246, %p247
      %s249 = ssub.s32 %s29, %s36
      %p250 = scmp.eq.s32.totalorder %s249, 0
      %s252 = sadd.s32 %s251, 1
      %s253 = scalar_select %p250, %s251, %s252
      %p256 = pneg %p250
      %p257 = scmp.eq.s32.totalorder %s21, 3
      %p258 = por %p256, %p257
      %p259 = scmp.ne.s32.totalorder %s251, %s254
      %p260 = scmp.eq.s32.totalorder %s21, 0
      %p261 = por %p259, %p260
      %p262 = scmp.ne.s32.totalorder %s251, %s254
      %p263 = scmp.eq.s32.totalorder %s26, 3
      %p264 = por %p262, %p263
      %p265 = scmp.ne.s32.totalorder %s254, %s255
      %p266 = scmp.eq.s32.totalorder %s26, 0
      %p267 = por %p265, %p266
      %p268 = scmp.ne.s32.totalorder %s254, %s255
      %p269 = scmp.eq.s32.totalorder %s27, 3
      %p270 = por %p268, %p269
      %p272 = scmp.ne.s32.totalorder %s255, %s271
      %p273 = scmp.eq.s32.totalorder %s27, 0
      %p274 = por %p272, %p273
      %s275 = ssub.s32 %s29, %s36
      %p276 = scmp.eq.s32.totalorder %s275, 0
      %s278 = sadd.s32 %s277, 1
      %s279 = scalar_select %p276, %s277, %s278
      %p282 = pneg %p276
      %p283 = scmp.eq.s32.totalorder %s21, 3
      %p284 = por %p282, %p283
      %p285 = scmp.ne.s32.totalorder %s277, %s280
      %p286 = scmp.eq.s32.totalorder %s21, 0
      %p287 = por %p285, %p286
      %p288 = scmp.ne.s32.totalorder %s277, %s280
      %p289 = scmp.eq.s32.totalorder %s26, 3
      %p290 = por %p288, %p289
      %p291 = scmp.ne.s32.totalorder %s280, %s281
      %p292 = scmp.eq.s32.totalorder %s26, 0
      %p293 = por %p291, %p292
      %p294 = scmp.ne.s32.totalorder %s280, %s281
      %p295 = scmp.eq.s32.totalorder %s27, 3
      %p296 = por %p294, %p295
      %p298 = scmp.ne.s32.totalorder %s281, %s297
      %p299 = scmp.eq.s32.totalorder %s27, 0
      %p300 = por %p298, %p299
      %s301 = ssub.s32 %s28, %s40
      %p302 = scmp.eq.s32.totalorder %s301, 0
      %s304 = sadd.s32 %s303, 1
      %s305 = scalar_select %p302, %s303, %s304
      %p308 = pneg %p302
      %p309 = scmp.eq.s32.totalorder %s21, 3
      %p310 = por %p308, %p309
      %p311 = scmp.ne.s32.totalorder %s303, %s306
      %p312 = scmp.eq.s32.totalorder %s21, 0
      %p313 = por %p311, %p312
      %p314 = scmp.ne.s32.totalorder %s303, %s306
      %p315 = scmp.eq.s32.totalorder %s26, 3
      %p316 = por %p314, %p315
      %p317 = scmp.ne.s32.totalorder %s306, %s307
      %p318 = scmp.eq.s32.totalorder %s26, 0
      %p319 = por %p317, %p318
      %p320 = scmp.ne.s32.totalorder %s306, %s307
      %p321 = scmp.eq.s32.totalorder %s27, 3
      %p322 = por %p320, %p321
      %p324 = scmp.ne.s32.totalorder %s307, %s323
      %p325 = scmp.eq.s32.totalorder %s27, 0
      %p326 = por %p324, %p325
      %s327 = ssub.s32 %s29, %s36
      %s328 = ssub.s32 %s28, %s40
      %s329 = sor.u32 %s327, %s328
      %p330 = scmp.eq.s32.totalorder %s329, 0
      %s332 = sadd.s32 %s331, 1
      %s333 = scalar_select %p330, %s331, %s332
      %p336 = pneg %p330
      %p337 = scmp.eq.s32.totalorder %s21, 3
      %p338 = por %p336, %p337
      %p339 = scmp.ne.s32.totalorder %s331, %s334
      %p340 = scmp.eq.s32.totalorder %s21, 0
      %p341 = por %p339, %p340
      %p342 = scmp.ne.s32.totalorder %s331, %s334
      %p343 = scmp.eq.s32.totalorder %s26, 3
      %p344 = por %p342, %p343
      %p345 = scmp.ne.s32.totalorder %s334, %s335
      %p346 = scmp.eq.s32.totalorder %s26, 0
      %p347 = por %p345, %p346
      %p348 = scmp.ne.s32.totalorder %s334, %s335
      %p349 = scmp.eq.s32.totalorder %s27, 3
      %p350 = por %p348, %p349
      %p352 = scmp.ne.s32.totalorder %s335, %s351
      %p353 = scmp.eq.s32.totalorder %s27, 0
      %p354 = por %p352, %p353
      %p355 = scmp.le.s32.totalorder 1, %s21
      %p356 = scmp.lt.s32.totalorder %s21, 5
      %p357 = pnand %p355, %p356
      %p358 = pneg %p357
      // Predicated region
      $region9: #{decoder_forward.1} parent=5 // pred_check
        _
      $region10: #{decoder_forward.1} parent=5 // pred_check_branch
        %360 = sbr.rel (%p357) target = $region12
      $region11: #{decoder_forward.1} parent=5 // pred_region
        %s361 = ssub.s32 %s21, 1
      $region12: #{decoder_forward.1} parent=5 // pred_fallthru
        _
      %p362 = scmp.lt.s32.totalorder %s21, 4
      // Predicated region
      $region13: #{decoder_forward.1} parent=5 // pred_check
        %p363 = pneg %p362
      $region14: #{decoder_forward.1} parent=5 // pred_check_branch
        %365 = sbr.rel (%p363) target = $region16
      $region15: #{decoder_forward.1} parent=5 // pred_region
        // Predicated region
        $region17: #{decoder_forward.1} parent=15 // pred_check
          %p366 = pneg %p53
        $region18: #{decoder_forward.1} parent=15 // pred_check_branch
          %368 = sbr.rel (%p366) target = $region20
        $region19: #{decoder_forward.1} parent=15 // pred_region
          %p369 = scmp.lt.s32.totalorder %s28, 1
          %s370 = scalar_select %p369, %s28, 1
          %s371 = smul.addr %s370, 8
          %s372 = scalar_lea.vmem %s0, %s371
        $region20: #{decoder_forward.1} parent=15 // pred_fallthru
          _
        // Predicated region
        $region21: #{decoder_forward.1} parent=15 // pred_check
          %p373 = pneg %p79
        $region22: #{decoder_forward.1} parent=15 // pred_check_branch
          %375 = sbr.rel (%p373) target = $region24
        $region23: #{decoder_forward.1} parent=15 // pred_region
          %p376 = scmp.lt.s32.totalorder %s28, 1
          %s377 = scalar_select %p376, %s28, 1
          %s378 = scalar_lea.vmem %s1, %s377
        $region24: #{decoder_forward.1} parent=15 // pred_fallthru
          _
        // Predicated region
        $region25: #{decoder_forward.1} parent=15 // pred_check
          %p379 = pneg %p105
        $region26: #{decoder_forward.1} parent=15 // pred_check_branch
          %381 = sbr.rel (%p379) target = $region28
        $region27: #{decoder_forward.1} parent=15 // pred_region
          %p382 = scmp.lt.s32.totalorder %s29, 1
          %s383 = scalar_select %p382, %s29, 1
          %s384 = smul.addr %s383, 4
          %s385 = smul.addr %s384, 4
          %s386 = scalar_lea.vmem %s2, %s385
        $region28: #{decoder_forward.1} parent=15 // pred_fallthru
          _
        // Predicated region
        $region29: #{decoder_forward.1} parent=15 // pred_check
          %p387 = pneg %p131
        $region30: #{decoder_forward.1} parent=15 // pred_check_branch
          %389 = sbr.rel (%p387) target = $region32
        $region31: #{decoder_forward.1} parent=15 // pred_region
          %p390 = scmp.lt.s32.totalorder %s29, 1
          %s391 = scalar_select %p390, %s29, 1
          %s392 = smul.addr %s391, 4
          %s393 = smul.addr %s392, 4
          %s394 = scalar_lea.vmem %s3, %s393
        $region32: #{decoder_forward.1} parent=15 // pred_fallthru
          _
        // Predicated region
        $region33: #{decoder_forward.1} parent=15 // pred_check
          %p395 = pneg %p157
        $region34: #{decoder_forward.1} parent=15 // pred_check_branch
          %397 = sbr.rel (%p395) target = $region36
        $region35: #{decoder_forward.1} parent=15 // pred_region
          %p398 = scmp.lt.s32.totalorder %s29, 1
          %s399 = scalar_select %p398, %s29, 1
          %s400 = scalar_lea.vmem %s4, %s399
        $region36: #{decoder_forward.1} parent=15 // pred_fallthru
          _
        // Predicated region
        $region37: #{decoder_forward.1} parent=15 // pred_check
          %p401 = pneg %p183
        $region38: #{decoder_forward.1} parent=15 // pred_check_branch
          %403 = sbr.rel (%p401) target = $region40
        $region39: #{decoder_forward.1} parent=15 // pred_region
          %p404 = scmp.lt.s32.totalorder %s29, 1
          %s405 = scalar_select %p404, %s29, 1
          %s406 = scalar_lea.vmem %s5, %s405
        $region40: #{decoder_forward.1} parent=15 // pred_fallthru
          _
        // Predicated region
        $region41: #{decoder_forward.1} parent=15 // pred_check
          %p407 = pneg %p209
        $region42: #{decoder_forward.1} parent=15 // pred_check_branch
          %409 = sbr.rel (%p407) target = $region44
        $region43: #{decoder_forward.1} parent=15 // pred_region
          %p410 = scmp.lt.s32.totalorder %s29, 1
          %s411 = scalar_select %p410, %s29, 1
          %s412 = smul.addr %s411, 4
          %s413 = smul.addr %s412, 4
          %s414 = scalar_lea.vmem %s6, %s413
        $region44: #{decoder_forward.1} parent=15 // pred_fallthru
          _
        // Predicated region
        $region45: #{decoder_forward.1} parent=15 // pred_check
          %p415 = pneg %p235
        $region46: #{decoder_forward.1} parent=15 // pred_check_branch
          %417 = sbr.rel (%p415) target = $region48
        $region47: #{decoder_forward.1} parent=15 // pred_region
          %p418 = scmp.lt.s32.totalorder %s29, 1
          %s419 = scalar_select %p418, %s29, 1
          %s420 = smul.addr %s419, 8
          %s421 = smul.addr %s420, 4
          %s422 = scalar_lea.vmem %s7, %s421
        $region48: #{decoder_forward.1} parent=15 // pred_fallthru
          _
        // Predicated region
        $region49: #{decoder_forward.1} parent=15 // pred_check
          %p423 = pneg %p261
        $region50: #{decoder_forward.1} parent=15 // pred_check_branch
          %425 = sbr.rel (%p423) target = $region52
        $region51: #{decoder_forward.1} parent=15 // pred_region
          %p426 = scmp.lt.s32.totalorder %s29, 1
          %s427 = scalar_select %p426, %s29, 1
          %s428 = scalar_lea.vmem %s8, %s427
        $region52: #{decoder_forward.1} parent=15 // pred_fallthru
          _
        // Predicated region
        $region53: #{decoder_forward.1} parent=15 // pred_check
          %p429 = pneg %p287
        $region54: #{decoder_forward.1} parent=15 // pred_check_branch
          %431 = sbr.rel (%p429) target = $region56
        $region55: #{decoder_forward.1} parent=15 // pred_region
          %p432 = scmp.lt.s32.totalorder %s29, 1
          %s433 = scalar_select %p432, %s29, 1
          %s434 = scalar_lea.vmem %s9, %s433
        $region56: #{decoder_forward.1} parent=15 // pred_fallthru
          _
      $region16: #{decoder_forward.1} parent=5 // pred_fallthru
        _
      %p435 = scmp.le.s32.totalorder 1, %s21
      %p436 = scmp.lt.s32.totalorder %s21, 5
      %p437 = pnand %p435, %p436
      %p438 = pneg %p437
      // Predicated region
      $region57: #{decoder_forward.1} parent=5 // pred_check
        _
      $region58: #{decoder_forward.1} parent=5 // pred_check_branch
        %440 = sbr.rel (%p437) target = $region60
      $region59: #{decoder_forward.1} parent=5 // pred_region
        %s441 = ssub.s32 %s21, 1
        %p442 = scmp.lt.s32.totalorder %s30, 1
        %s443 = scalar_select %p442, %s30, 1
        %s444 = smul.addr %s443, 8
        %s445 = scalar_lea.vmem %s0, %s444
        %p446 = pneg %p59
        %p447 = pneg %p56
        %p448 = scmp.lt.s32.totalorder %s30, 1
        %s449 = scalar_select %p448, %s30, 1
        %s450 = scalar_lea.vmem %s1, %s449
        %p451 = pneg %p85
        %p452 = pneg %p82
        %p453 = scmp.lt.s32.totalorder %s31, 1
        %s454 = scalar_select %p453, %s31, 1
        %s455 = smul.addr %s454, 4
        %s456 = smul.addr %s455, 4
        %s457 = scalar_lea.vmem %s2, %s456
        %p458 = pneg %p111
        %p459 = pneg %p108
        %p460 = scmp.lt.s32.totalorder %s31, 1
        %s461 = scalar_select %p460, %s31, 1
        %s462 = smul.addr %s461, 4
        %s463 = smul.addr %s462, 4
        %s464 = scalar_lea.vmem %s3, %s463
        %p465 = pneg %p137
        %p466 = pneg %p134
        %p467 = scmp.lt.s32.totalorder %s31, 1
        %s468 = scalar_select %p467, %s31, 1
        %s469 = scalar_lea.vmem %s4, %s468
        %p470 = pneg %p163
        %p471 = pneg %p160
        %p472 = scmp.lt.s32.totalorder %s31, 1
        %s473 = scalar_select %p472, %s31, 1
        %s474 = scalar_lea.vmem %s5, %s473
        %p475 = pneg %p189
        %p476 = pneg %p186
        %p477 = scmp.lt.s32.totalorder %s31, 1
        %s478 = scalar_select %p477, %s31, 1
        %s479 = smul.addr %s478, 4
        %s480 = smul.addr %s479, 4
        %s481 = scalar_lea.vmem %s6, %s480
        %p482 = pneg %p215
        %p483 = pneg %p212
        %p484 = scmp.lt.s32.totalorder %s31, 1
        %s485 = scalar_select %p484, %s31, 1
        %s486 = smul.addr %s485, 8
        %s487 = smul.addr %s486, 4
        %s488 = scalar_lea.vmem %s7, %s487
        %p489 = pneg %p241
        %p490 = pneg %p238
        %p491 = scmp.lt.s32.totalorder %s31, 1
        %s492 = scalar_select %p491, %s31, 1
        %s493 = scalar_lea.vmem %s8, %s492
        %p494 = pneg %p267
        %p495 = pneg %p264
        %p496 = scmp.lt.s32.totalorder %s31, 1
        %s497 = scalar_select %p496, %s31, 1
        %s498 = scalar_lea.vmem %s9, %s497
        %p499 = pneg %p293
        %p500 = pneg %p290
        %p501 = pneg %p319
        %p502 = pneg %p316
        %s503 = sand.u32 %s306, 1
        %s504 = scalar_lea.sflag [#allocation5], %s503
        %s505 = sand.u32 %s306, 1
        %s506 = smul.addr %s505, 8
        %s507 = scalar_lea.vmem [#allocation4], %s506
        %p508 = pneg %p347
        %p509 = pneg %p344
        %p510 = scmp.lt.s32.totalorder %s31, 1
        %s511 = scalar_select %p510, %s31, 1
        %p512 = scmp.lt.s32.totalorder %s30, 1
        %s513 = scalar_select %p512, %s30, 1
        %s514 = smul.addr %s513, 4
        %s515 = smul.addr %s511, 8
        %s516 = sadd.s32 %s514, %s515
        %s517 = smul.addr %s516, 4
        %s518 = scalar_lea.vmem %s11, %s517
        %p519 = scmp.lt.s32.totalorder %s30, 1
        %s520 = scalar_select %p519, %s30, 1
        %s521 = smul.addr %s520, 8
        %s522 = scalar_lea.vmem %s0, %s521
        %p523 = scmp.lt.s32.totalorder %s30, 1
        %s524 = scalar_select %p523, %s30, 1
        %s525 = scalar_lea.vmem %s1, %s524
        %p526 = scmp.lt.s32.totalorder %s31, 1
        %s527 = scalar_select %p526, %s31, 1
        %s528 = smul.addr %s527, 4
        %s529 = smul.addr %s528, 4
        %s530 = scalar_lea.vmem %s2, %s529
        %p531 = scmp.lt.s32.totalorder %s31, 1
        %s532 = scalar_select %p531, %s31, 1
        %s533 = smul.addr %s532, 4
        %s534 = smul.addr %s533, 4
        %s535 = scalar_lea.vmem %s3, %s534
        %p536 = scmp.lt.s32.totalorder %s31, 1
        %s537 = scalar_select %p536, %s31, 1
        %s538 = scalar_lea.vmem %s4, %s537
        %p539 = scmp.lt.s32.totalorder %s31, 1
        %s540 = scalar_select %p539, %s31, 1
        %s541 = scalar_lea.vmem %s5, %s540
        %p542 = scmp.lt.s32.totalorder %s31, 1
        %s543 = scalar_select %p542, %s31, 1
        %s544 = smul.addr %s543, 4
        %s545 = smul.addr %s544, 4
        %s546 = scalar_lea.vmem %s6, %s545
        %p547 = scmp.lt.s32.totalorder %s31, 1
        %s548 = scalar_select %p547, %s31, 1
        %s549 = smul.addr %s548, 8
        %s550 = smul.addr %s549, 4
        %s551 = scalar_lea.vmem %s7, %s550
        %p552 = scmp.lt.s32.totalorder %s31, 1
        %s553 = scalar_select %p552, %s31, 1
        %s554 = scalar_lea.vmem %s8, %s553
        %p555 = scmp.lt.s32.totalorder %s31, 1
        %s556 = scalar_select %p555, %s31, 1
        %s557 = scalar_lea.vmem %s9, %s556
        %p558 = scmp.lt.s32.totalorder %s31, 1
        %s559 = scalar_select %p558, %s31, 1
        %p560 = scmp.lt.s32.totalorder %s30, 1
        %s561 = scalar_select %p560, %s30, 1
        %s562 = smul.addr %s561, 4
        %s563 = smul.addr %s559, 8
        %s564 = sadd.s32 %s562, %s563
        %s565 = smul.addr %s564, 4
        %s566 = scalar_lea.vmem %s11, %s565
        %p568 = scmp.eq.s32.totalorder %s31, 0
        // Predicated region
        $region61: #{decoder_forward.1} parent=59 // pred_check
          %p569 = pneg %p568
        $region62: #{decoder_forward.1} parent=59 // pred_check_branch
          %571 = sbr.rel (%p569) target = $region64
        $region63: #{decoder_forward.1} parent=59 // pred_region
          %v572 = vld [vmem:[%s522] sm:$0xff]
          %vm573 = vcmask 261120
          %574 = vst.msk [vmem:[%s507] sm:$0xff] %vm573, %v572
          %v575 = vlaneseq
          %v576 = vshrl.u32 %v575, 7
          %v577 = vlaneseq
          %v578 = vand.u32 %v577, 127
          %vm579 = vcmp.gt.s32.totalorder %v578, %v576
          %v580 = vsel %vm579, 1, 0
          %v581 = vcvt.s32.f32 %v580
          %v582 = vld [vmem:[%s525] sm:$0x1]
          %v584 = vperm.slane %v582, 0
          %v586 = vmax.f32 %v581, %v584
          %vm587 = vcmask 64512
          %588 = vst.msk [vmem:[#allocation3] sm:$0xff] %vm587, %v586
        $region64: #{decoder_forward.1} parent=59 // pred_fallthru
          _
        %v589 = vld [vmem:[%s507] sm:$0xff]
        %v590 = vpack.c.bf16 %v589, %v589
        %v591 = vld [vmem:[%s530] sm:$0xf]
        %v592 = vld [vmem:[%s530 + $0x4] sm:$0xf]
        %v593 = vld [vmem:[%s530 + $0x8] sm:$0xf]
        %v594 = vld [vmem:[%s530 + $0xc] sm:$0xf]
        %v599 = vunpack.c.l.b16 %v591
        %v600 = vunpack.c.l.b16 %v592
        %v601 = vunpack.c.l.b16 %v593
        %v602 = vunpack.c.l.b16 %v594
        %v603 = vpack.c.b16 %v600, %v599
        %v604 = vpack.c.b16 %v602, %v601
        %vm607 = vcmask 261120
        %v609 = vsel %vm607, %v590, 0
        %611 = vmatpush.bf16.msra.mxu0 0
        %612 = vmatpush.bf16.msra.mxu0 0
        %613 = vmatpush.bf16.msra.mxu0 0
        %614 = vmatpush.bf16.msra.mxu0 0
        %615 = vmatpush.bf16.msra.mxu0 0
        %616 = vmatpush.bf16.msra.mxu0 0
        %617 = vmatpush.bf16.msra.mxu0 %v604
        %618 = vmatpush.bf16.msra.mxu0 %v603
        %619 = vmatmul.bf16.gmra.mxu0 %v609
        %v620 = vpop.f32.mrf.mxu0
        %v621 = vadd.f32 0.0, %v620
        %v622 = vpop.f32.mrf.mxu0
        %623 = vdwg.mxu0
        %v624 = vpack.c.bf16 %v621, %v621
        %vm625 = vcmask 60416
        %626 = vst.msk [vmem:[#allocation2] sm:$0xf] %vm625, %v624
        %628 = vrot.lane.b32.xlu0 %v624, 96
        %v629 = vpop.permute.xlu0 %628
        %s631 = scalar_lea.vmem [#allocation2], 16
        %632 = vst.msk [vmem:[%s631] sm:$0xf] %vm625, %v629
        %633 = vrot.lane.b32.xlu0 %v624, 64
        %v634 = vpop.permute.xlu0 %633
        %s636 = scalar_lea.vmem [#allocation2], 32
        %637 = vst.msk [vmem:[%s636] sm:$0xf] %vm625, %v634
        %638 = vrot.lane.b32.xlu0 %v624, 120
        %v639 = vpop.permute.xlu0 %638
        %s641 = scalar_lea.vmem [#allocation2], 4
        %642 = vst.msk [vmem:[%s641] sm:$0xf] %vm625, %v639
        %643 = vrot.lane.b32.xlu0 %v624, 88
        %v644 = vpop.permute.xlu0 %643
        %s646 = scalar_lea.vmem [#allocation2], 20
        %647 = vst.msk [vmem:[%s646] sm:$0xf] %vm625, %v644
        %648 = vrot.lane.b32.xlu0 %v624, 56
        %v649 = vpop.permute.xlu0 %648
        %s651 = scalar_lea.vmem [#allocation2], 36
        %652 = vst.msk [vmem:[%s651] sm:$0xf] %vm625, %v649
        %653 = vrot.lane.b32.xlu0 %v624, 112
        %v654 = vpop.permute.xlu0 %653
        %s656 = scalar_lea.vmem [#allocation2], 8
        %657 = vst.msk [vmem:[%s656] sm:$0xf] %vm625, %v654
        %658 = vrot.lane.b32.xlu0 %v624, 80
        %v659 = vpop.permute.xlu0 %658
        %s661 = scalar_lea.vmem [#allocation2], 24
        %662 = vst.msk [vmem:[%s661] sm:$0xf] %vm625, %v659
        %663 = vrot.lane.b32.xlu0 %v624, 48
        %v664 = vpop.permute.xlu0 %663
        %s666 = scalar_lea.vmem [#allocation2], 40
        %667 = vst.msk [vmem:[%s666] sm:$0xf] %vm625, %v664
        %668 = vrot.lane.b32.xlu0 %v624, 104
        %v669 = vpop.permute.xlu0 %668
        %s671 = scalar_lea.vmem [#allocation2], 12
        %672 = vst.msk [vmem:[%s671] sm:$0xf] %vm625, %v669
        %673 = vrot.lane.b32.xlu0 %v624, 72
        %v674 = vpop.permute.xlu0 %673
        %s676 = scalar_lea.vmem [#allocation2], 28
        %677 = vst.msk [vmem:[%s676] sm:$0xf] %vm625, %v674
        %678 = vrot.lane.b32.xlu0 %v624, 40
        %v679 = vpop.permute.xlu0 %678
        %s681 = scalar_lea.vmem [#allocation2], 44
        %682 = vst.msk [vmem:[%s681] sm:$0xf] %vm625, %v679
        %v683 = vld [vmem:[#allocation2] sm:$0xf]
        %v684 = vld [vmem:[#allocation2 + $0x4] sm:$0xf]
        %v685 = vld [vmem:[#allocation2 + $0x8] sm:$0xf]
        %v686 = vld [vmem:[#allocation2 + $0xc] sm:$0xf]
        %v687 = vld [vmem:[%s631] sm:$0xf]
        %v688 = vld [vmem:[%s631 + $0x4] sm:$0xf]
        %v689 = vld [vmem:[%s631 + $0x8] sm:$0xf]
        %v690 = vld [vmem:[%s631 + $0xc] sm:$0xf]
        %v691 = vld [vmem:[%s636] sm:$0xf]
        %v692 = vld [vmem:[%s636 + $0x4] sm:$0xf]
        %v693 = vld [vmem:[%s636 + $0x8] sm:$0xf]
        %v694 = vld [vmem:[%s636 + $0xc] sm:$0xf]
        %vm695 = vcmask 64512
        %v697 = vsel %vm695, %v683, 0
        %v700 = vsel %vm695, %v687, 0
        %702 = vmatpush.bf16.xpose.msra.mxu0 0
        %703 = vmatpush.bf16.xpose.msra.mxu0 0
        %704 = vmatpush.bf16.xpose.msra.mxu0 0
        %705 = vmatpush.bf16.xpose.msra.mxu0 0
        %706 = vmatpush.bf16.xpose.msra.mxu0 0
        %707 = vmatpush.bf16.xpose.msra.mxu0 0
        %708 = vmatpush.bf16.xpose.msra.mxu0 0
        %709 = vmatpush.bf16.xpose.msra.mxu0 %v700
        %710 = vmatmul.bf16.gmra.mxu0 %v697
        %v711 = vpop.f32.mrf.mxu0
        %v712 = vadd.f32 0.0, %v711
        %v713 = vpop.f32.mrf.mxu0
        %714 = vdwg.mxu0
        %v716 = vsel %vm695, %v684, 0
        %v719 = vsel %vm695, %v688, 0
        %721 = vmatpush.bf16.xpose.msra.mxu0 0
        %722 = vmatpush.bf16.xpose.msra.mxu0 0
        %723 = vmatpush.bf16.xpose.msra.mxu0 0
        %724 = vmatpush.bf16.xpose.msra.mxu0 0
        %725 = vmatpush.bf16.xpose.msra.mxu0 0
        %726 = vmatpush.bf16.xpose.msra.mxu0 0
        %727 = vmatpush.bf16.xpose.msra.mxu0 0
        %728 = vmatpush.bf16.xpose.msra.mxu0 %v719
        %729 = vmatmul.bf16.gmra.mxu0 %v716
        %v730 = vpop.f32.mrf.mxu0
        %v731 = vadd.f32 0.0, %v730
        %v732 = vpop.f32.mrf.mxu0
        %733 = vdwg.mxu0
        %v735 = vsel %vm695, %v685, 0
        %v738 = vsel %vm695, %v689, 0
        %740 = vmatpush.bf16.xpose.msra.mxu0 0
        %741 = vmatpush.bf16.xpose.msra.mxu0 0
        %742 = vmatpush.bf16.xpose.msra.mxu0 0
        %743 = vmatpush.bf16.xpose.msra.mxu0 0
        %744 = vmatpush.bf16.xpose.msra.mxu0 0
        %745 = vmatpush.bf16.xpose.msra.mxu0 0
        %746 = vmatpush.bf16.xpose.msra.mxu0 0
        %747 = vmatpush.bf16.xpose.msra.mxu0 %v738
        %748 = vmatmul.bf16.gmra.mxu0 %v735
        %v749 = vpop.f32.mrf.mxu0
        %v750 = vadd.f32 0.0, %v749
        %v751 = vpop.f32.mrf.mxu0
        %752 = vdwg.mxu0
        %v754 = vsel %vm695, %v686, 0
        %v757 = vsel %vm695, %v690, 0
        %759 = vmatpush.bf16.xpose.msra.mxu0 0
        %760 = vmatpush.bf16.xpose.msra.mxu0 0
        %761 = vmatpush.bf16.xpose.msra.mxu0 0
        %762 = vmatpush.bf16.xpose.msra.mxu0 0
        %763 = vmatpush.bf16.xpose.msra.mxu0 0
        %764 = vmatpush.bf16.xpose.msra.mxu0 0
        %765 = vmatpush.bf16.xpose.msra.mxu0 0
        %766 = vmatpush.bf16.xpose.msra.mxu0 %v757
        %767 = vmatmul.bf16.gmra.mxu0 %v754
        %v768 = vpop.f32.mrf.mxu0
        %v769 = vadd.f32 0.0, %v768
        %v770 = vpop.f32.mrf.mxu0
        %771 = vdwg.mxu0
        %v772 = vld [vmem:[#allocation3] sm:$0xff]
        %vm773 = vcmp.gt.f32.partialorder %v772, 0.0
        %v774 = vsel %vm773, 1, 0
        %vm775 = vcmp.eq.s32.totalorder %v774, 1
        %v776 = vsel %vm775, -1e+09, %v712
        %v777 = vsel %vm775, -1e+09, %v731
        %v778 = vsel %vm775, -1e+09, %v750
        %v779 = vsel %vm775, -1e+09, %v769
        %v780 = vsel %vm695, %v776, -inf
        %781 = vmax.xlane.f32.xlu0 %v780
        %v782 = vpop.xlane.xlu0 %781
        %v783 = vsel %vm695, %v777, -inf
        %784 = vmax.xlane.f32.xlu0 %v783
        %v785 = vpop.xlane.xlu0 %784
        %v786 = vsel %vm695, %v778, -inf
        %787 = vmax.xlane.f32.xlu0 %v786
        %v788 = vpop.xlane.xlu0 %787
        %v789 = vsel %vm695, %v779, -inf
        %790 = vmax.xlane.f32.xlu0 %v789
        %v791 = vpop.xlane.xlu0 %790
        %v792 = vsub.f32 %v776, %v782
        %v793 = vsub.f32 %v777, %v785
        %v794 = vsub.f32 %v778, %v788
        %v795 = vsub.f32 %v779, %v791
        %v796 = vmul.f32 %v792, 1.442695
        %v797 = vpow.pop %v796
        %v798 = vmul.f32 %v793, 1.442695
        %v799 = vpow.pop %v798
        %v800 = vmul.f32 %v794, 1.442695
        %v801 = vpow.pop %v800
        %v802 = vmul.f32 %v795, 1.442695
        %v803 = vpow.pop %v802
        %v804 = vsel %vm695, %v797, 0.0
        %805 = vadd.xlane.f32.xlu0 %v804
        %v806 = vpop.xlane.xlu0 %805
        %v807 = vsel %vm695, %v799, 0.0
        %808 = vadd.xlane.f32.xlu0 %v807
        %v809 = vpop.xlane.xlu0 %808
        %v810 = vsel %vm695, %v801, 0.0
        %811 = vadd.xlane.f32.xlu0 %v810
        %v812 = vpop.xlane.xlu0 %811
        %v813 = vsel %vm695, %v803, 0.0
        %814 = vadd.xlane.f32.xlu0 %v813
        %v815 = vpop.xlane.xlu0 %814
        %v816 = vrcp.pop %v806
        %v817 = vrcp.pop %v809
        %v818 = vrcp.pop %v812
        %v819 = vrcp.pop %v815
        %v820 = vmul.f32 %v797, %v816
        %v821 = vmul.f32 %v799, %v817
        %v822 = vmul.f32 %v801, %v818
        %v823 = vmul.f32 %v803, %v819
        %v824 = vpack.c.bf16 %v820, %v820
        %v825 = vpack.c.bf16 %v821, %v821
        %v826 = vpack.c.bf16 %v822, %v822
        %v827 = vpack.c.bf16 %v823, %v823
        %828 = vst.msk [vmem:[%s566] sm:$0xf] %vm625, %v824
        %829 = vst.msk [vmem:[%s566 + $0x4] sm:$0xf] %vm625, %v825
        %830 = vst.msk [vmem:[%s566 + $0x8] sm:$0xf] %vm625, %v826
        %831 = vst.msk [vmem:[%s566 + $0xc] sm:$0xf] %vm625, %v827
        %v833 = vsel %vm695, %v824, 0
        %vm835 = vcmask 1043456
        %v837 = vsel %vm835, %v691, 0
        %839 = vmatpush.bf16.msra.mxu0 0
        %840 = vmatpush.bf16.msra.mxu0 0
        %841 = vmatpush.bf16.msra.mxu0 0
        %842 = vmatpush.bf16.msra.mxu0 0
        %843 = vmatpush.bf16.msra.mxu0 0
        %844 = vmatpush.bf16.msra.mxu0 0
        %845 = vmatpush.bf16.msra.mxu0 0
        %846 = vmatpush.bf16.msra.mxu0 %v837
        %847 = vmatmul.bf16.gmra.mxu0 %v833
        %v848 = vpop.f32.mrf.mxu0
        %v849 = vadd.f32 0.0, %v848
        %v850 = vpop.f32.mrf.mxu0
        %851 = vdwg.mxu0
        %v853 = vsel %vm695, %v825, 0
        %v856 = vsel %vm835, %v692, 0
        %858 = vmatpush.bf16.msra.mxu0 0
        %859 = vmatpush.bf16.msra.mxu0 0
        %860 = vmatpush.bf16.msra.mxu0 0
        %861 = vmatpush.bf16.msra.mxu0 0
        %862 = vmatpush.bf16.msra.mxu0 0
        %863 = vmatpush.bf16.msra.mxu0 0
        %864 = vmatpush.bf16.msra.mxu0 0
        %865 = vmatpush.bf16.msra.mxu0 %v856
        %866 = vmatmul.bf16.gmra.mxu0 %v853
        %v867 = vpop.f32.mrf.mxu0
        %v868 = vadd.f32 0.0, %v867
        %v869 = vpop.f32.mrf.mxu0
        %870 = vdwg.mxu0
        %v872 = vsel %vm695, %v826, 0
        %v875 = vsel %vm835, %v693, 0
        %877 = vmatpush.bf16.msra.mxu0 0
        %878 = vmatpush.bf16.msra.mxu0 0
        %879 = vmatpush.bf16.msra.mxu0 0
        %880 = vmatpush.bf16.msra.mxu0 0
        %881 = vmatpush.bf16.msra.mxu0 0
        %882 = vmatpush.bf16.msra.mxu0 0
        %883 = vmatpush.bf16.msra.mxu0 0
        %884 = vmatpush.bf16.msra.mxu0 %v875
        %885 = vmatmul.bf16.gmra.mxu0 %v872
        %v886 = vpop.f32.mrf.mxu0
        %v887 = vadd.f32 0.0, %v886
        %v888 = vpop.f32.mrf.mxu0
        %889 = vdwg.mxu0
        %v891 = vsel %vm695, %v827, 0
        %v894 = vsel %vm835, %v694, 0
        %896 = vmatpush.bf16.msra.mxu0 0
        %897 = vmatpush.bf16.msra.mxu0 0
        %898 = vmatpush.bf16.msra.mxu0 0
        %899 = vmatpush.bf16.msra.mxu0 0
        %900 = vmatpush.bf16.msra.mxu0 0
        %901 = vmatpush.bf16.msra.mxu0 0
        %902 = vmatpush.bf16.msra.mxu0 0
        %903 = vmatpush.bf16.msra.mxu0 %v894
        %904 = vmatmul.bf16.gmra.mxu0 %v891
        %v905 = vpop.f32.mrf.mxu0
        %v906 = vadd.f32 0.0, %v905
        %v907 = vpop.f32.mrf.mxu0
        %908 = vdwg.mxu0
        %v909 = vpack.c.bf16 %v849, %v849
        %v910 = vpack.c.bf16 %v868, %v868
        %v911 = vpack.c.bf16 %v887, %v887
        %v912 = vpack.c.bf16 %v906, %v906
        %v913 = vld [vmem:[%s535] sm:$0xf]
        %v914 = vld [vmem:[%s535 + $0x4] sm:$0xf]
        %v915 = vld [vmem:[%s535 + $0x8] sm:$0xf]
        %v916 = vld [vmem:[%s535 + $0xc] sm:$0xf]
        %v918 = vsel %vm695, %v909, 0
        %v921 = vsel %vm835, %v913, 0
        %923 = vmatpush.bf16.msra.mxu0 0
        %924 = vmatpush.bf16.msra.mxu0 0
        %925 = vmatpush.bf16.msra.mxu0 0
        %926 = vmatpush.bf16.msra.mxu0 0
        %927 = vmatpush.bf16.msra.mxu0 0
        %928 = vmatpush.bf16.msra.mxu0 0
        %929 = vmatpush.bf16.msra.mxu0 0
        %930 = vmatpush.bf16.msra.mxu0 %v921
        %931 = vmatmul.bf16.gmra.mxu0 %v918
        %v932 = vpop.f32.mrf.mxu0
        %v933 = vadd.f32 0.0, %v932
        %v934 = vpop.f32.mrf.mxu0
        %935 = vdwg.mxu0
        %v937 = vsel %vm695, %v910, 0
        %v940 = vsel %vm835, %v914, 0
        %942 = vmatpush.bf16.msra.mxu0 0
        %943 = vmatpush.bf16.msra.mxu0 0
        %944 = vmatpush.bf16.msra.mxu0 0
        %945 = vmatpush.bf16.msra.mxu0 0
        %946 = vmatpush.bf16.msra.mxu0 0
        %947 = vmatpush.bf16.msra.mxu0 0
        %948 = vmatpush.bf16.msra.mxu0 0
        %949 = vmatpush.bf16.msra.mxu0 %v940
        %950 = vmatmul.bf16.gmra.mxu0 %v937
        %v951 = vpop.f32.mrf.mxu0
        %v952 = vadd.f32 0.0, %v951
        %v953 = vpop.f32.mrf.mxu0
        %954 = vdwg.mxu0
        %v956 = vsel %vm695, %v911, 0
        %v959 = vsel %vm835, %v915, 0
        %961 = vmatpush.bf16.msra.mxu0 0
        %962 = vmatpush.bf16.msra.mxu0 0
        %963 = vmatpush.bf16.msra.mxu0 0
        %964 = vmatpush.bf16.msra.mxu0 0
        %965 = vmatpush.bf16.msra.mxu0 0
        %966 = vmatpush.bf16.msra.mxu0 0
        %967 = vmatpush.bf16.msra.mxu0 0
        %968 = vmatpush.bf16.msra.mxu0 %v959
        %969 = vmatmul.bf16.gmra.mxu0 %v956
        %v970 = vpop.f32.mrf.mxu0
        %v971 = vadd.f32 0.0, %v970
        %v972 = vpop.f32.mrf.mxu0
        %973 = vdwg.mxu0
        %v975 = vsel %vm695, %v912, 0
        %v978 = vsel %vm835, %v916, 0
        %980 = vmatpush.bf16.msra.mxu0 0
        %981 = vmatpush.bf16.msra.mxu0 0
        %982 = vmatpush.bf16.msra.mxu0 0
        %983 = vmatpush.bf16.msra.mxu0 0
        %984 = vmatpush.bf16.msra.mxu0 0
        %985 = vmatpush.bf16.msra.mxu0 0
        %986 = vmatpush.bf16.msra.mxu0 0
        %987 = vmatpush.bf16.msra.mxu0 %v978
        %988 = vmatmul.bf16.gmra.mxu0 %v975
        %v989 = vpop.f32.mrf.mxu0
        %v990 = vadd.f32 0.0, %v989
        %v991 = vpop.f32.mrf.mxu0
        %992 = vdwg.mxu0
        %v993 = vsel %vm607, %v933, 0.0
        %v994 = vsel %vm607, %v952, 0.0
        %v995 = vadd.f32 %v993, %v994
        %v996 = vsel %vm607, %v971, 0.0
        %v997 = vadd.f32 %v995, %v996
        %v998 = vsel %vm607, %v990, 0.0
        %v999 = vadd.f32 %v997, %v998
        %v1000 = vadd.f32 %v999, %v589
        %v1001 = vsel %vm607, %v1000, 0.0
        %1002 = vadd.xlane.f32.xlu0 %v1001
        %v1003 = vpop.xlane.xlu0 %1002
        %v1004 = vrcp.pop 32.0
        %v1005 = vmul.f32 32.0, %v1004
        %v1006 = vsub.f32 1.0, %v1005
        %v1007 = vmul.f32 %v1004, %v1006
        %v1008 = vadd.f32 %v1004, %v1007
        %vm1009 = vweird.f32 %v1004
        %v1010 = vsel %vm1009, %v1004, %v1008
        %v1011 = vmul.f32 %v1003, %v1010
        %v1012 = vsub.f32 %v1000, %v1011
        %v1013 = vmul.f32 %v1012, %v1012
        %v1014 = vsel %vm607, %v1013, 0.0
        %1015 = vadd.xlane.f32.xlu0 %v1014
        %v1016 = vpop.xlane.xlu0 %1015
        %v1017 = vmul.f32 %v1016, %v1010
        %v1018 = vadd.f32 %v1017, 1e-05
        %v1019 = vrsqrt.pop %v1018
        %v1020 = vmul.f32 %v1019, %v1018
        %v1021 = vmul.f32 %v1020, %v1019
        %v1022 = vmul.f32 0.5, %v1021
        %v1023 = vsub.f32 1.5, %v1022
        %v1024 = vmul.f32 %v1019, %v1023
        %vm1025 = vweird.f32 %v1018
        %vm1026 = vweird.f32 %v1019
        %vm1027 = vmor %vm1025, %vm1026
        %v1028 = vsel %vm1027, %v1019, %v1024
        %v1029 = vmul.f32 %v1012, %v1028
        %v1030 = vld [vmem:[%s538] sm:$0x1]
        %v1032 = vperm.slane %v1030, 0
        %v1034 = vmul.f32 %v1029, %v1032
        %v1035 = vld [vmem:[%s541] sm:$0x1]
        %v1037 = vperm.slane %v1035, 0
        %v1039 = vadd.f32 %v1034, %v1037
        %v1040 = vpack.c.bf16 %v1039, %v1039
        %v1041 = vld [vmem:[%s546] sm:$0xf]
        %v1042 = vld [vmem:[%s546 + $0x4] sm:$0xf]
        %v1043 = vld [vmem:[%s546 + $0x8] sm:$0xf]
        %v1044 = vld [vmem:[%s546 + $0xc] sm:$0xf]
        %v1049 = vunpack.c.l.b16 %v1041
        %v1050 = vunpack.c.l.b16 %v1042
        %v1051 = vunpack.c.l.b16 %v1043
        %v1052 = vunpack.c.l.b16 %v1044
        %v1053 = vpack.c.b16 %v1050, %v1049
        %v1054 = vpack.c.b16 %v1052, %v1051
        %v1058 = vsel %vm607, %v1040, 0
        %1060 = vmatpush.bf16.msra.mxu0 0
        %1061 = vmatpush.bf16.msra.mxu0 0
        %1062 = vmatpush.bf16.msra.mxu0 0
        %1063 = vmatpush.bf16.msra.mxu0 0
        %1064 = vmatpush.bf16.msra.mxu0 0
        %1065 = vmatpush.bf16.msra.mxu0 0
        %1066 = vmatpush.bf16.msra.mxu0 %v1054
        %1067 = vmatpush.bf16.msra.mxu0 %v1053
        %1068 = vmatmul.bf16.gmra.mxu0 %v1058
        %v1069 = vpop.f32.mrf.mxu0
        %v1070 = vadd.f32 0.0, %v1069
        %v1071 = vpop.f32.mrf.mxu0
        %1072 = vdwg.mxu0
        %v1073 = vmax.f32 %v1070, 0.0
        %v1074 = vpack.c.bf16 %v1073, %v1073
        %v1075 = vld [vmem:[%s551] sm:$0xf]
        %v1076 = vld [vmem:[%s551 + $0x4] sm:$0xf]
        %v1077 = vld [vmem:[%s551 + $0x8] sm:$0xf]
        %v1078 = vld [vmem:[%s551 + $0xc] sm:$0xf]
        %v1079 = vld [vmem:[%s551 + $0x10] sm:$0xf]
        %v1080 = vld [vmem:[%s551 + $0x14] sm:$0xf]
        %v1081 = vld [vmem:[%s551 + $0x18] sm:$0xf]
        %v1082 = vld [vmem:[%s551 + $0x1c] sm:$0xf]
        %v1091 = vunpack.c.l.b16 %v1075
        %v1092 = vunpack.c.l.b16 %v1076
        %v1093 = vunpack.c.l.b16 %v1077
        %v1094 = vunpack.c.l.b16 %v1078
        %v1095 = vunpack.c.l.b16 %v1079
        %v1096 = vunpack.c.l.b16 %v1080
        %v1097 = vunpack.c.l.b16 %v1081
        %v1098 = vunpack.c.l.b16 %v1082
        %v1099 = vpack.c.b16 %v1092, %v1091
        %v1100 = vpack.c.b16 %v1094, %v1093
        %v1101 = vpack.c.b16 %v1096, %v1095
        %v1102 = vpack.c.b16 %v1098, %v1097
        %vm1107 = vcmask 523264
        %v1109 = vsel %vm1107, %v1074, 0
        %1111 = vmatpush.bf16.msra.mxu0 0
        %1112 = vmatpush.bf16.msra.mxu0 0
        %1113 = vmatpush.bf16.msra.mxu0 0
        %1114 = vmatpush.bf16.msra.mxu0 0
        %1115 = vmatpush.bf16.msra.mxu0 %v1102
        %1116 = vmatpush.bf16.msra.mxu0 %v1101
        %1117 = vmatpush.bf16.msra.mxu0 %v1100
        %1118 = vmatpush.bf16.msra.mxu0 %v1099
        %1119 = vmatmul.bf16.gmra.mxu0 %v1109
        %v1120 = vpop.f32.mrf.mxu0
        %v1121 = vadd.f32 %v1039, %v1120
        %v1122 = vpop.f32.mrf.mxu0
        %1123 = vdwg.mxu0
        %v1124 = vsel %vm607, %v1121, 0.0
        %1125 = vadd.xlane.f32.xlu0 %v1124
        %v1126 = vpop.xlane.xlu0 %1125
        %v1127 = vmul.f32 %v1126, %v1010
        %v1128 = vsub.f32 %v1121, %v1127
        %v1129 = vmul.f32 %v1128, %v1128
        %v1130 = vsel %vm607, %v1129, 0.0
        %1131 = vadd.xlane.f32.xlu0 %v1130
        %v1132 = vpop.xlane.xlu0 %1131
        %v1133 = vmul.f32 %v1132, %v1010
        %v1134 = vadd.f32 %v1133, 1e-05
        %v1135 = vrsqrt.pop %v1134
        %v1136 = vmul.f32 %v1135, %v1134
        %v1137 = vmul.f32 %v1136, %v1135
        %v1138 = vmul.f32 0.5, %v1137
        %v1139 = vsub.f32 1.5, %v1138
        %v1140 = vmul.f32 %v1135, %v1139
        %vm1141 = vweird.f32 %v1134
        %vm1142 = vweird.f32 %v1135
        %vm1143 = vmor %vm1141, %vm1142
        %v1144 = vsel %vm1143, %v1135, %v1140
        %v1145 = vmul.f32 %v1128, %v1144
        %v1146 = vld [vmem:[%s554] sm:$0x1]
        %v1148 = vperm.slane %v1146, 0
        %v1150 = vmul.f32 %v1145, %v1148
        %v1151 = vld [vmem:[%s557] sm:$0x1]
        %v1153 = vperm.slane %v1151, 0
        %v1155 = vadd.f32 %v1150, %v1153
        %1156 = vst.msk [vmem:[%s507] sm:$0xff] %vm607, %v1155
        %s1157 = sand.u32 %s306, 1
        %s1158 = scalar_lea.sflag [#allocation5], %s1157
        %s1159 = sand.u32 %s306, 1
        %s1160 = smul.addr %s1159, 8
        %s1161 = scalar_lea.vmem [#allocation4], %s1160
        %p1162 = scmp.lt.s32.totalorder %s31, 1
        %s1163 = scalar_select %p1162, %s31, 1
        %p1164 = scmp.lt.s32.totalorder %s30, 1
        %s1165 = scalar_select %p1164, %s30, 1
        %s1166 = smul.addr %s1165, 4
        %s1167 = smul.addr %s1163, 8
        %s1168 = sadd.s32 %s1166, %s1167
        %s1169 = smul.addr %s1168, 4
        %s1170 = scalar_lea.vmem %s11, %s1169
        // Predicated region
        $region65: #{decoder_forward.1} parent=59 // pred_check
          %p1171 = pneg %p316
        $region66: #{decoder_forward.1} parent=59 // pred_check_branch
          %1173 = sbr.rel (%p1171) target = $region68
        $region67: #{decoder_forward.1} parent=59 // pred_region
          %1175 = vsyncadd %s1158, 0
          %s1176 = smul.addr %s30, 8
          %s1177 = scalar_lea.hbm %s10, %s1176
          %s1179 = sshll.u32 %s1161, 4
          %s1180 = int_to_ptr.vmem [resolvable:$true] %s1179
          %s1181 = sshll.u32 %s1177, 4
          %s1182 = int_to_ptr.hbm [resolvable:$true] %s1181
          %1184 = dma.vmem_to_hbm [thread:$0]  %s1180, 128, %s1182, %s1158
        $region68: #{decoder_forward.1} parent=59 // pred_fallthru
          _
        // Predicated region
        $region69: #{decoder_forward.1} parent=59 // pred_check
          %p1185 = pneg %p344
        $region70: #{decoder_forward.1} parent=59 // pred_check_branch
          %1187 = sbr.rel (%p1185) target = $region72
        $region71: #{decoder_forward.1} parent=59 // pred_region
          _
        $region72: #{decoder_forward.1} parent=59 // pred_fallthru
          _
      $region60: #{decoder_forward.1} parent=5 // pred_fallthru
        _
      %p1188 = scmp.le.s32.totalorder 2, %s21
      // Predicated region
      $region73: #{decoder_forward.1} parent=5 // pred_check
        %p1189 = pneg %p1188
      $region74: #{decoder_forward.1} parent=5 // pred_check_branch
        %1191 = sbr.rel (%p1189) target = $region76
      $region75: #{decoder_forward.1} parent=5 // pred_region
        %s1192 = ssub.s32 %s21, 2
        // Predicated region
        $region77: #{decoder_forward.1} parent=75 // pred_check
          %p1193 = pneg %p322
        $region78: #{decoder_forward.1} parent=75 // pred_check_branch
          %1195 = sbr.rel (%p1193) target = $region80
        $region79: #{decoder_forward.1} parent=75 // pred_region
          %s1196 = sand.u32 %s307, 1
          %s1197 = scalar_lea.sflag [#allocation5], %s1196
          %s1198 = sand.u32 %s307, 1
          %s1199 = smul.addr %s1198, 8
          %s1200 = scalar_lea.vmem [#allocation4], %s1199
          %1202 = dma.done %s1197, 128
        $region80: #{decoder_forward.1} parent=75 // pred_fallthru
          _
        // Predicated region
        $region81: #{decoder_forward.1} parent=75 // pred_check
          %p1203 = pneg %p350
        $region82: #{decoder_forward.1} parent=75 // pred_check_branch
          %1205 = sbr.rel (%p1203) target = $region84
        $region83: #{decoder_forward.1} parent=75 // pred_region
          %p1206 = scmp.lt.s32.totalorder %s33, 1
          %s1207 = scalar_select %p1206, %s33, 1
          %p1208 = scmp.lt.s32.totalorder %s32, 1
          %s1209 = scalar_select %p1208, %s32, 1
          %s1210 = smul.addr %s1209, 4
          %s1211 = smul.addr %s1207, 8
          %s1212 = sadd.s32 %s1210, %s1211
          %s1213 = smul.addr %s1212, 4
          %s1214 = scalar_lea.vmem %s11, %s1213
        $region84: #{decoder_forward.1} parent=75 // pred_fallthru
          _
      $region76: #{decoder_forward.1} parent=5 // pred_fallthru
        _
    $region6: #{decoder_forward.1} parent=1 // loop_footer
      %s25 = sadd.s32 1, %s21
    $region7: #{decoder_forward.1} parent=1 // loop_footer_branch
      %20 = sbr.rel target = $region3
    $region8: #{decoder_forward.1} parent=1 // loop_exit
      _
    %1215 = vsyncpa [#allocation5], 1
    %s1216 = scalar_lea.sflag [#allocation5], 1
    %1217 = vsyncpa %s1216, 1

</llo_original>
